<compile_context>
chip_gen: v5e
topology: v5e:2x2
jax: 0.10.0
libtpu: 0.0.40
codegen_flags: <defaults>
</compile_context>

<pallas_src>
import functools

import jax
import jax.numpy as jnp
from jax.experimental import pallas as pl
from jax.experimental.pallas import tpu as pltpu


def _norm_expand_shuffle_kernel(x_ref, g_ref, b_ref, w_ref, o_ref, *,
                                rows, width, scale, swc):
    # x_ref : (rows*width, C)        tokens of `rows` image rows (row-major h, then w)
    # g_ref : (1, C)                 LayerNorm gamma (f32)
    # b_ref : (1, C)                 LayerNorm beta  (f32)
    # w_ref : (C, Dout)              expand weight, Dout = scale*swc, bf16
    # o_ref : (rows*scale, width*swc) fused-shuffle output block (lane-dense)
    x = x_ref[...].astype(jnp.float32)
    mean = jnp.mean(x, axis=-1, keepdims=True)
    centered = x - mean
    var = jnp.mean(centered * centered, axis=-1, keepdims=True)
    xn = centered * jax.lax.rsqrt(var + 1e-5)
    xn = xn * g_ref[...].astype(jnp.float32) + b_ref[...].astype(jnp.float32)

    # bf16 x bf16 -> f32 accumulate: native MXU speed on v6e/v7x, halves weight traffic.
    y = jnp.dot(xn.astype(w_ref.dtype), w_ref[...],
                preferred_element_type=jnp.float32)          # (rows*width, scale*swc)

    # Fused pixel shuffle, done in VMEM:
    #   out[th*scale + sh, w*swc + j] = y[th*width + w, sh*swc + j]
    # Implemented with static slices + lane concatenation + per-row stores (robust lowering);
    # data volume per step is tiny vs. the HBM pass this replaces.
    for th in range(rows):
        blk = y[th * width:(th + 1) * width, :]              # (width, scale*swc)
        for sh in range(scale):
            row = jnp.concatenate(
                [blk[w:w + 1, sh * swc:(sh + 1) * swc] for w in range(width)],
                axis=1)                                       # (1, width*swc) lane-dense
            r = th * scale + sh
            o_ref[r:r + 1, :] = row.astype(o_ref.dtype)


def _rows_per_block(batch, h, w, s, target_tokens=2048):
    """Pick how many image rows each grid step processes.

    Constraints: divides H; keeps blocks (8,128)-legal (rows*W and rows*s are multiples of 8,
    or rows == H); targets ~`target_tokens` tokens per step; keeps >=2 grid steps when possible
    so both v7x TensorCores get work.
    """
    cands = [th for th in range(1, h + 1)
             if h % th == 0 and (th == h or ((th * w) % 8 == 0 and (th * s) % 8 == 0))]
    cands.sort(reverse=True)                                  # prefer big tiles
    fitting = [th for th in cands if th * w <= target_tokens] or [cands[-1]]
    for th in fitting:
        if batch * (h // th) >= 2:
            return th
    return fitting[0]


def patch_expanding(x, gamma, beta, w, *, scale_factor, out_channels,
                    target_tokens=2048):
    """x: (B, H, W, C) float32. Returns (B, H*s, W*s, out_channels)."""
    b, h, w_dim, c = x.shape
    s = scale_factor
    oc = out_channels
    swc = s * oc
    d_out = s * swc
    assert w.shape == (d_out, c)

    rows = _rows_per_block(b, h, w_dim, s, target_tokens)
    n_blocks = b * (h // rows)

    x_flat = x.reshape(b * h * w_dim, c)                      # tokens ordered (b, h, w)
    gamma2 = gamma.reshape(1, c).astype(jnp.float32)
    beta2 = beta.reshape(1, c).astype(jnp.float32)
    # PyTorch Linear weight is (Dout, C); y = x @ W.T.  bf16 for native MXU inputs.
    w_t = w.T.astype(jnp.bfloat16)                            # (C, Dout)

    kernel = functools.partial(_norm_expand_shuffle_kernel,
                               rows=rows, width=w_dim, scale=s, swc=swc)

    # Output is written already pixel-shuffled, as (B*H*s, W*s*out_c): every kernel store is
    # a full-lane (>=128-wide) row, and the final NHWC reshape below is metadata-only.
    # NOTE: gamma/beta/w_t are grid-invariant; pipeline_mode=pl.Buffered(1) would single-buffer
    # them (worth it for large C); left at the default here.
    y = pl.pallas_call(
        kernel,
        out_shape=jax.ShapeDtypeStruct((b * h * s, w_dim * swc), x.dtype),
        grid_spec=pltpu.PrefetchScalarGridSpec(
            num_scalar_prefetch=0,
            grid=(n_blocks,),
            in_specs=[
                pl.BlockSpec((rows * w_dim, c), lambda i: (i, 0)),
                pl.BlockSpec((1, c), lambda i: (0, 0)),
                pl.BlockSpec((1, c), lambda i: (0, 0)),
                pl.BlockSpec((c, d_out), lambda i: (0, 0)),
            ],
            out_specs=pl.BlockSpec((rows * s, w_dim * swc), lambda i: (i, 0)),
        ),
        compiler_params=pltpu.CompilerParams(
            dimension_semantics=("parallel",)),
    )(x_flat, gamma2, beta2, w_t)

    # Free metadata reshape: (B*H*s, W*s*out_c) -> (B, H*s, W*s, out_c)  (no transpose).
    return y.reshape(b, h * s, w_dim * s, oc)


def _reference(x, gamma, beta, w, *, scale_factor, out_channels):
    # Pure-f32 reference of the PyTorch module (LayerNorm -> Linear -> pixel shuffle).
    b, h, w_dim, c = x.shape
    s = scale_factor
    xf = x.reshape(b, -1, c).astype(jnp.float32)
    mean = jnp.mean(xf, axis=-1, keepdims=True)
    var = jnp.mean((xf - mean) ** 2, axis=-1, keepdims=True)
    xn = (xf - mean) * jax.lax.rsqrt(var + 1e-5) * gamma + beta
    y = xn @ w.T.astype(jnp.float32)
    y = y.reshape(b, h, w_dim, s, s, out_channels)
    y = jnp.transpose(y, (0, 1, 3, 2, 4, 5))
    return y.reshape(b, h * s, w_dim * s, out_channels).astype(x.dtype)


if __name__ == "__main__":
    in_channels = 32
    out_channels = 16
    scale_factor = 2
    B, H, W = 2, 8, 8

    key = jax.random.PRNGKey(0)
    kx, kw, kg, kb = jax.random.split(key, 4)

    x = jax.random.normal(kx, (B, H, W, in_channels), dtype=jnp.float32)
    d_out = scale_factor ** 2 * out_channels
    # nn.Linear(in_channels, s^2*out_channels, bias=False): weight (Dout, Cin)
    w = jax.random.normal(kw, (d_out, in_channels), dtype=jnp.float32) * 0.05
    gamma = 1.0 + 0.1 * jax.random.normal(kg, (in_channels,), dtype=jnp.float32)
    beta = 0.1 * jax.random.normal(kb, (in_channels,), dtype=jnp.float32)

    out = patch_expanding(x, gamma, beta, w,
                          scale_factor=scale_factor, out_channels=out_channels)
    out = jax.block_until_ready(out)

    ref = _reference(x, gamma, beta, w,
                     scale_factor=scale_factor, out_channels=out_channels)
    assert out.shape == (B, H * scale_factor, W * scale_factor, out_channels)
    # Kernel feeds bf16 operands to the MXU (f32 accumulate) per perf guidance; tolerance
    # reflects bf16 input rounding (~2^-9 relative) vs. the pure-f32 reference.
    assert jnp.allclose(out, ref, atol=2e-2, rtol=2e-2)

    print("KERNEL_OK")
</pallas_src>

<mosaic_0001>
module attributes {stable_mosaic.version = 11 : i64} {
  func.func @_norm_expand_shuffle_kernel(%arg0: i32, %arg1: memref<64x32xf32, #tpu.memory_space<vmem>>, %arg2: memref<1x32xf32, #tpu.memory_space<vmem>>, %arg3: memref<1x32xf32, #tpu.memory_space<vmem>>, %arg4: memref<32x64xbf16, #tpu.memory_space<vmem>>, %arg5: memref<16x256xf32, #tpu.memory_space<vmem>>) attributes {dimension_semantics = [#tpu.dimension_semantics<parallel>], iteration_bounds = array<i64: 2>, scalar_prefetch = 0 : i64, scratch_operands = 0 : i64, tpu.core_type = #tpu.core_type<tc>, window_params = [{transform_indices = @transform_0, window_bounds = array<i64: 64, 32>}, {pipeline_mode = #tpu.pipeline_mode<synchronous>, transform_indices = @transform_1, window_bounds = array<i64: 1, 32>}, {pipeline_mode = #tpu.pipeline_mode<synchronous>, transform_indices = @transform_2, window_bounds = array<i64: 1, 32>}, {pipeline_mode = #tpu.pipeline_mode<synchronous>, transform_indices = @transform_3, window_bounds = array<i64: 32, 64>}, {transform_indices = @transform_4, window_bounds = array<i64: 16, 256>}]} {
    %c0 = arith.constant 0 : index
    %c0_0 = arith.constant 0 : index
    %0 = vector.load %arg1[%c0, %c0_0] : memref<64x32xf32, #tpu.memory_space<vmem>>, vector<64x32xf32>
    %cst = arith.constant dense<0.000000e+00> : vector<64xf32>
    %1 = vector.multi_reduction <add>, %0, %cst [1] : vector<64x32xf32> to vector<64xf32>
    %2 = vector.shape_cast %1 : vector<64xf32> to vector<64x1xf32>
    %cst_1 = arith.constant 3.200000e+01 : f32
    %3 = vector.broadcast %cst_1 : f32 to vector<64x1xf32>
    %4 = arith.divf %2, %3 : vector<64x1xf32>
    %5 = vector.broadcast %4 : vector<64x1xf32> to vector<64x32xf32>
    %6 = arith.subf %0, %5 : vector<64x32xf32>
    %7 = arith.mulf %6, %6 : vector<64x32xf32>
    %cst_2 = arith.constant dense<0.000000e+00> : vector<64xf32>
    %8 = vector.multi_reduction <add>, %7, %cst_2 [1] : vector<64x32xf32> to vector<64xf32>
    %9 = vector.shape_cast %8 : vector<64xf32> to vector<64x1xf32>
    %cst_3 = arith.constant 3.200000e+01 : f32
    %10 = vector.broadcast %cst_3 : f32 to vector<64x1xf32>
    %11 = arith.divf %9, %10 : vector<64x1xf32>
    %cst_4 = arith.constant 9.99999974E-6 : f32
    %12 = vector.broadcast %cst_4 : f32 to vector<64x1xf32>
    %13 = arith.addf %11, %12 : vector<64x1xf32>
    %14 = math.rsqrt %13 : vector<64x1xf32>
    %15 = vector.broadcast %14 : vector<64x1xf32> to vector<64x32xf32>
    %16 = arith.mulf %6, %15 : vector<64x32xf32>
    %c0_5 = arith.constant 0 : index
    %c0_6 = arith.constant 0 : index
    %17 = vector.load %arg2[%c0_5, %c0_6] : memref<1x32xf32, #tpu.memory_space<vmem>>, vector<1x32xf32>
    %18 = vector.broadcast %17 : vector<1x32xf32> to vector<64x32xf32>
    %19 = arith.mulf %16, %18 : vector<64x32xf32>
    %c0_7 = arith.constant 0 : index
    %c0_8 = arith.constant 0 : index
    %20 = vector.load %arg3[%c0_7, %c0_8] : memref<1x32xf32, #tpu.memory_space<vmem>>, vector<1x32xf32>
    %21 = vector.broadcast %20 : vector<1x32xf32> to vector<64x32xf32>
    %22 = arith.addf %19, %21 : vector<64x32xf32>
    %23 = arith.truncf %22 : vector<64x32xf32> to vector<64x32xbf16>
    %c0_9 = arith.constant 0 : index
    %c0_10 = arith.constant 0 : index
    %24 = vector.load %arg4[%c0_9, %c0_10] : memref<32x64xbf16, #tpu.memory_space<vmem>>, vector<32x64xbf16>
    %cst_11 = arith.constant dense<0.000000e+00> : vector<64x64xf32>
    %25 = tpu.matmul %23, %24, %cst_11 {dimension_numbers = #tpu.dot_dimension_numbers<[1], [0], [0], [1], [0, 0, 1, 1], [], []>} : vector<64x32xbf16>, vector<32x64xbf16>, vector<64x64xf32> -> vector<64x64xf32>
    %26 = vector.extract_strided_slice %25 {offsets = [0, 0], sizes = [8, 64], strides = [1, 1]} : vector<64x64xf32> to vector<8x64xf32>
    %27 = vector.extract_strided_slice %26 {offsets = [0, 0], sizes = [1, 32], strides = [1, 1]} : vector<8x64xf32> to vector<1x32xf32>
    %28 = vector.extract_strided_slice %26 {offsets = [1, 0], sizes = [1, 32], strides = [1, 1]} : vector<8x64xf32> to vector<1x32xf32>
    %29 = vector.extract_strided_slice %26 {offsets = [2, 0], sizes = [1, 32], strides = [1, 1]} : vector<8x64xf32> to vector<1x32xf32>
    %30 = vector.extract_strided_slice %26 {offsets = [3, 0], sizes = [1, 32], strides = [1, 1]} : vector<8x64xf32> to vector<1x32xf32>
    %31 = vector.extract_strided_slice %26 {offsets = [4, 0], sizes = [1, 32], strides = [1, 1]} : vector<8x64xf32> to vector<1x32xf32>
    %32 = vector.extract_strided_slice %26 {offsets = [5, 0], sizes = [1, 32], strides = [1, 1]} : vector<8x64xf32> to vector<1x32xf32>
    %33 = vector.extract_strided_slice %26 {offsets = [6, 0], sizes = [1, 32], strides = [1, 1]} : vector<8x64xf32> to vector<1x32xf32>
    %34 = vector.extract_strided_slice %26 {offsets = [7, 0], sizes = [1, 32], strides = [1, 1]} : vector<8x64xf32> to vector<1x32xf32>
    %35 = tpu.concatenate %27, %28, %29, %30, %31, %32, %33, %34 in 1 : vector<1x32xf32>, vector<1x32xf32>, vector<1x32xf32>, vector<1x32xf32>, vector<1x32xf32>, vector<1x32xf32>, vector<1x32xf32>, vector<1x32xf32> -> vector<1x256xf32>
    %c0_12 = arith.constant 0 : index
    %c0_13 = arith.constant 0 : index
    %36 = vector.load %arg5[%c0_12, %c0_13] : memref<16x256xf32, #tpu.memory_space<vmem>>, vector<1x256xf32>
    tpu.vector_store %arg5[%c0_12, %c0_13], %35 {strides = array<i32>} : memref<16x256xf32, #tpu.memory_space<vmem>>, vector<1x256xf32>,
    %37 = vector.extract_strided_slice %26 {offsets = [0, 32], sizes = [1, 32], strides = [1, 1]} : vector<8x64xf32> to vector<1x32xf32>
    %38 = vector.extract_strided_slice %26 {offsets = [1, 32], sizes = [1, 32], strides = [1, 1]} : vector<8x64xf32> to vector<1x32xf32>
    %39 = vector.extract_strided_slice %26 {offsets = [2, 32], sizes = [1, 32], strides = [1, 1]} : vector<8x64xf32> to vector<1x32xf32>
    %40 = vector.extract_strided_slice %26 {offsets = [3, 32], sizes = [1, 32], strides = [1, 1]} : vector<8x64xf32> to vector<1x32xf32>
    %41 = vector.extract_strided_slice %26 {offsets = [4, 32], sizes = [1, 32], strides = [1, 1]} : vector<8x64xf32> to vector<1x32xf32>
    %42 = vector.extract_strided_slice %26 {offsets = [5, 32], sizes = [1, 32], strides = [1, 1]} : vector<8x64xf32> to vector<1x32xf32>
    %43 = vector.extract_strided_slice %26 {offsets = [6, 32], sizes = [1, 32], strides = [1, 1]} : vector<8x64xf32> to vector<1x32xf32>
    %44 = vector.extract_strided_slice %26 {offsets = [7, 32], sizes = [1, 32], strides = [1, 1]} : vector<8x64xf32> to vector<1x32xf32>
    %45 = tpu.concatenate %37, %38, %39, %40, %41, %42, %43, %44 in 1 : vector<1x32xf32>, vector<1x32xf32>, vector<1x32xf32>, vector<1x32xf32>, vector<1x32xf32>, vector<1x32xf32>, vector<1x32xf32>, vector<1x32xf32> -> vector<1x256xf32>
    %c1 = arith.constant 1 : index
    %c0_14 = arith.constant 0 : index
    %46 = vector.load %arg5[%c1, %c0_14] : memref<16x256xf32, #tpu.memory_space<vmem>>, vector<1x256xf32>
    tpu.vector_store %arg5[%c1, %c0_14], %45 {strides = array<i32>} : memref<16x256xf32, #tpu.memory_space<vmem>>, vector<1x256xf32>,
    %47 = vector.extract_strided_slice %25 {offsets = [8, 0], sizes = [8, 64], strides = [1, 1]} : vector<64x64xf32> to vector<8x64xf32>
    %48 = vector.extract_strided_slice %47 {offsets = [0, 0], sizes = [1, 32], strides = [1, 1]} : vector<8x64xf32> to vector<1x32xf32>
    %49 = vector.extract_strided_slice %47 {offsets = [1, 0], sizes = [1, 32], strides = [1, 1]} : vector<8x64xf32> to vector<1x32xf32>
    %50 = vector.extract_strided_slice %47 {offsets = [2, 0], sizes = [1, 32], strides = [1, 1]} : vector<8x64xf32> to vector<1x32xf32>
    %51 = vector.extract_strided_slice %47 {offsets = [3, 0], sizes = [1, 32], strides = [1, 1]} : vector<8x64xf32> to vector<1x32xf32>
    %52 = vector.extract_strided_slice %47 {offsets = [4, 0], sizes = [1, 32], strides = [1, 1]} : vector<8x64xf32> to vector<1x32xf32>
    %53 = vector.extract_strided_slice %47 {offsets = [5, 0], sizes = [1, 32], strides = [1, 1]} : vector<8x64xf32> to vector<1x32xf32>
    %54 = vector.extract_strided_slice %47 {offsets = [6, 0], sizes = [1, 32], strides = [1, 1]} : vector<8x64xf32> to vector<1x32xf32>
    %55 = vector.extract_strided_slice %47 {offsets = [7, 0], sizes = [1, 32], strides = [1, 1]} : vector<8x64xf32> to vector<1x32xf32>
    %56 = tpu.concatenate %48, %49, %50, %51, %52, %53, %54, %55 in 1 : vector<1x32xf32>, vector<1x32xf32>, vector<1x32xf32>, vector<1x32xf32>, vector<1x32xf32>, vector<1x32xf32>, vector<1x32xf32>, vector<1x32xf32> -> vector<1x256xf32>
    %c2 = arith.constant 2 : index
    %c0_15 = arith.constant 0 : index
    %57 = vector.load %arg5[%c2, %c0_15] : memref<16x256xf32, #tpu.memory_space<vmem>>, vector<1x256xf32>
    tpu.vector_store %arg5[%c2, %c0_15], %56 {strides = array<i32>} : memref<16x256xf32, #tpu.memory_space<vmem>>, vector<1x256xf32>,
    %58 = vector.extract_strided_slice %47 {offsets = [0, 32], sizes = [1, 32], strides = [1, 1]} : vector<8x64xf32> to vector<1x32xf32>
    %59 = vector.extract_strided_slice %47 {offsets = [1, 32], sizes = [1, 32], strides = [1, 1]} : vector<8x64xf32> to vector<1x32xf32>
    %60 = vector.extract_strided_slice %47 {offsets = [2, 32], sizes = [1, 32], strides = [1, 1]} : vector<8x64xf32> to vector<1x32xf32>
    %61 = vector.extract_strided_slice %47 {offsets = [3, 32], sizes = [1, 32], strides = [1, 1]} : vector<8x64xf32> to vector<1x32xf32>
    %62 = vector.extract_strided_slice %47 {offsets = [4, 32], sizes = [1, 32], strides = [1, 1]} : vector<8x64xf32> to vector<1x32xf32>
    %63 = vector.extract_strided_slice %47 {offsets = [5, 32], sizes = [1, 32], strides = [1, 1]} : vector<8x64xf32> to vector<1x32xf32>
    %64 = vector.extract_strided_slice %47 {offsets = [6, 32], sizes = [1, 32], strides = [1, 1]} : vector<8x64xf32> to vector<1x32xf32>
    %65 = vector.extract_strided_slice %47 {offsets = [7, 32], sizes = [1, 32], strides = [1, 1]} : vector<8x64xf32> to vector<1x32xf32>
    %66 = tpu.concatenate %58, %59, %60, %61, %62, %63, %64, %65 in 1 : vector<1x32xf32>, vector<1x32xf32>, vector<1x32xf32>, vector<1x32xf32>, vector<1x32xf32>, vector<1x32xf32>, vector<1x32xf32>, vector<1x32xf32> -> vector<1x256xf32>
    %c3 = arith.constant 3 : index
    %c0_16 = arith.constant 0 : index
    %67 = vector.load %arg5[%c3, %c0_16] : memref<16x256xf32, #tpu.memory_space<vmem>>, vector<1x256xf32>
    tpu.vector_store %arg5[%c3, %c0_16], %66 {strides = array<i32>} : memref<16x256xf32, #tpu.memory_space<vmem>>, vector<1x256xf32>,
    %68 = vector.extract_strided_slice %25 {offsets = [16, 0], sizes = [8, 64], strides = [1, 1]} : vector<64x64xf32> to vector<8x64xf32>
    %69 = vector.extract_strided_slice %68 {offsets = [0, 0], sizes = [1, 32], strides = [1, 1]} : vector<8x64xf32> to vector<1x32xf32>
    %70 = vector.extract_strided_slice %68 {offsets = [1, 0], sizes = [1, 32], strides = [1, 1]} : vector<8x64xf32> to vector<1x32xf32>
    %71 = vector.extract_strided_slice %68 {offsets = [2, 0], sizes = [1, 32], strides = [1, 1]} : vector<8x64xf32> to vector<1x32xf32>
    %72 = vector.extract_strided_slice %68 {offsets = [3, 0], sizes = [1, 32], strides = [1, 1]} : vector<8x64xf32> to vector<1x32xf32>
    %73 = vector.extract_strided_slice %68 {offsets = [4, 0], sizes = [1, 32], strides = [1, 1]} : vector<8x64xf32> to vector<1x32xf32>
    %74 = vector.extract_strided_slice %68 {offsets = [5, 0], sizes = [1, 32], strides = [1, 1]} : vector<8x64xf32> to vector<1x32xf32>
    %75 = vector.extract_strided_slice %68 {offsets = [6, 0], sizes = [1, 32], strides = [1, 1]} : vector<8x64xf32> to vector<1x32xf32>
    %76 = vector.extract_strided_slice %68 {offsets = [7, 0], sizes = [1, 32], strides = [1, 1]} : vector<8x64xf32> to vector<1x32xf32>
    %77 = tpu.concatenate %69, %70, %71, %72, %73, %74, %75, %76 in 1 : vector<1x32xf32>, vector<1x32xf32>, vector<1x32xf32>, vector<1x32xf32>, vector<1x32xf32>, vector<1x32xf32>, vector<1x32xf32>, vector<1x32xf32> -> vector<1x256xf32>
    %c4 = arith.constant 4 : index
    %c0_17 = arith.constant 0 : index
    %78 = vector.load %arg5[%c4, %c0_17] : memref<16x256xf32, #tpu.memory_space<vmem>>, vector<1x256xf32>
    tpu.vector_store %arg5[%c4, %c0_17], %77 {strides = array<i32>} : memref<16x256xf32, #tpu.memory_space<vmem>>, vector<1x256xf32>,
    %79 = vector.extract_strided_slice %68 {offsets = [0, 32], sizes = [1, 32], strides = [1, 1]} : vector<8x64xf32> to vector<1x32xf32>
    %80 = vector.extract_strided_slice %68 {offsets = [1, 32], sizes = [1, 32], strides = [1, 1]} : vector<8x64xf32> to vector<1x32xf32>
    %81 = vector.extract_strided_slice %68 {offsets = [2, 32], sizes = [1, 32], strides = [1, 1]} : vector<8x64xf32> to vector<1x32xf32>
    %82 = vector.extract_strided_slice %68 {offsets = [3, 32], sizes = [1, 32], strides = [1, 1]} : vector<8x64xf32> to vector<1x32xf32>
    %83 = vector.extract_strided_slice %68 {offsets = [4, 32], sizes = [1, 32], strides = [1, 1]} : vector<8x64xf32> to vector<1x32xf32>
    %84 = vector.extract_strided_slice %68 {offsets = [5, 32], sizes = [1, 32], strides = [1, 1]} : vector<8x64xf32> to vector<1x32xf32>
    %85 = vector.extract_strided_slice %68 {offsets = [6, 32], sizes = [1, 32], strides = [1, 1]} : vector<8x64xf32> to vector<1x32xf32>
    %86 = vector.extract_strided_slice %68 {offsets = [7, 32], sizes = [1, 32], strides = [1, 1]} : vector<8x64xf32> to vector<1x32xf32>
    %87 = tpu.concatenate %79, %80, %81, %82, %83, %84, %85, %86 in 1 : vector<1x32xf32>, vector<1x32xf32>, vector<1x32xf32>, vector<1x32xf32>, vector<1x32xf32>, vector<1x32xf32>, vector<1x32xf32>, vector<1x32xf32> -> vector<1x256xf32>
    %c5 = arith.constant 5 : index
    %c0_18 = arith.constant 0 : index
    %88 = vector.load %arg5[%c5, %c0_18] : memref<16x256xf32, #tpu.memory_space<vmem>>, vector<1x256xf32>
    tpu.vector_store %arg5[%c5, %c0_18], %87 {strides = array<i32>} : memref<16x256xf32, #tpu.memory_space<vmem>>, vector<1x256xf32>,
    %89 = vector.extract_strided_slice %25 {offsets = [24, 0], sizes = [8, 64], strides = [1, 1]} : vector<64x64xf32> to vector<8x64xf32>
    %90 = vector.extract_strided_slice %89 {offsets = [0, 0], sizes = [1, 32], strides = [1, 1]} : vector<8x64xf32> to vector<1x32xf32>
    %91 = vector.extract_strided_slice %89 {offsets = [1, 0], sizes = [1, 32], strides = [1, 1]} : vector<8x64xf32> to vector<1x32xf32>
    %92 = vector.extract_strided_slice %89 {offsets = [2, 0], sizes = [1, 32], strides = [1, 1]} : vector<8x64xf32> to vector<1x32xf32>
    %93 = vector.extract_strided_slice %89 {offsets = [3, 0], sizes = [1, 32], strides = [1, 1]} : vector<8x64xf32> to vector<1x32xf32>
    %94 = vector.extract_strided_slice %89 {offsets = [4, 0], sizes = [1, 32], strides = [1, 1]} : vector<8x64xf32> to vector<1x32xf32>
    %95 = vector.extract_strided_slice %89 {offsets = [5, 0], sizes = [1, 32], strides = [1, 1]} : vector<8x64xf32> to vector<1x32xf32>
    %96 = vector.extract_strided_slice %89 {offsets = [6, 0], sizes = [1, 32], strides = [1, 1]} : vector<8x64xf32> to vector<1x32xf32>
    %97 = vector.extract_strided_slice %89 {offsets = [7, 0], sizes = [1, 32], strides = [1, 1]} : vector<8x64xf32> to vector<1x32xf32>
    %98 = tpu.concatenate %90, %91, %92, %93, %94, %95, %96, %97 in 1 : vector<1x32xf32>, vector<1x32xf32>, vector<1x32xf32>, vector<1x32xf32>, vector<1x32xf32>, vector<1x32xf32>, vector<1x32xf32>, vector<1x32xf32> -> vector<1x256xf32>
    %c6 = arith.constant 6 : index
    %c0_19 = arith.constant 0 : index
    %99 = vector.load %arg5[%c6, %c0_19] : memref<16x256xf32, #tpu.memory_space<vmem>>, vector<1x256xf32>
    tpu.vector_store %arg5[%c6, %c0_19], %98 {strides = array<i32>} : memref<16x256xf32, #tpu.memory_space<vmem>>, vector<1x256xf32>,
    %100 = vector.extract_strided_slice %89 {offsets = [0, 32], sizes = [1, 32], strides = [1, 1]} : vector<8x64xf32> to vector<1x32xf32>
    %101 = vector.extract_strided_slice %89 {offsets = [1, 32], sizes = [1, 32], strides = [1, 1]} : vector<8x64xf32> to vector<1x32xf32>
    %102 = vector.extract_strided_slice %89 {offsets = [2, 32], sizes = [1, 32], strides = [1, 1]} : vector<8x64xf32> to vector<1x32xf32>
    %103 = vector.extract_strided_slice %89 {offsets = [3, 32], sizes = [1, 32], strides = [1, 1]} : vector<8x64xf32> to vector<1x32xf32>
    %104 = vector.extract_strided_slice %89 {offsets = [4, 32], sizes = [1, 32], strides = [1, 1]} : vector<8x64xf32> to vector<1x32xf32>
    %105 = vector.extract_strided_slice %89 {offsets = [5, 32], sizes = [1, 32], strides = [1, 1]} : vector<8x64xf32> to vector<1x32xf32>
    %106 = vector.extract_strided_slice %89 {offsets = [6, 32], sizes = [1, 32], strides = [1, 1]} : vector<8x64xf32> to vector<1x32xf32>
    %107 = vector.extract_strided_slice %89 {offsets = [7, 32], sizes = [1, 32], strides = [1, 1]} : vector<8x64xf32> to vector<1x32xf32>
    %108 = tpu.concatenate %100, %101, %102, %103, %104, %105, %106, %107 in 1 : vector<1x32xf32>, vector<1x32xf32>, vector<1x32xf32>, vector<1x32xf32>, vector<1x32xf32>, vector<1x32xf32>, vector<1x32xf32>, vector<1x32xf32> -> vector<1x256xf32>
    %c7 = arith.constant 7 : index
    %c0_20 = arith.constant 0 : index
    %109 = vector.load %arg5[%c7, %c0_20] : memref<16x256xf32, #tpu.memory_space<vmem>>, vector<1x256xf32>
    tpu.vector_store %arg5[%c7, %c0_20], %108 {strides = array<i32>} : memref<16x256xf32, #tpu.memory_space<vmem>>, vector<1x256xf32>,
    %110 = vector.extract_strided_slice %25 {offsets = [32, 0], sizes = [8, 64], strides = [1, 1]} : vector<64x64xf32> to vector<8x64xf32>
    %111 = vector.extract_strided_slice %110 {offsets = [0, 0], sizes = [1, 32], strides = [1, 1]} : vector<8x64xf32> to vector<1x32xf32>
    %112 = vector.extract_strided_slice %110 {offsets = [1, 0], sizes = [1, 32], strides = [1, 1]} : vector<8x64xf32> to vector<1x32xf32>
    %113 = vector.extract_strided_slice %110 {offsets = [2, 0], sizes = [1, 32], strides = [1, 1]} : vector<8x64xf32> to vector<1x32xf32>
    %114 = vector.extract_strided_slice %110 {offsets = [3, 0], sizes = [1, 32], strides = [1, 1]} : vector<8x64xf32> to vector<1x32xf32>
    %115 = vector.extract_strided_slice %110 {offsets = [4, 0], sizes = [1, 32], strides = [1, 1]} : vector<8x64xf32> to vector<1x32xf32>
    %116 = vector.extract_strided_slice %110 {offsets = [5, 0], sizes = [1, 32], strides = [1, 1]} : vector<8x64xf32> to vector<1x32xf32>
    %117 = vector.extract_strided_slice %110 {offsets = [6, 0], sizes = [1, 32], strides = [1, 1]} : vector<8x64xf32> to vector<1x32xf32>
    %118 = vector.extract_strided_slice %110 {offsets = [7, 0], sizes = [1, 32], strides = [1, 1]} : vector<8x64xf32> to vector<1x32xf32>
    %119 = tpu.concatenate %111, %112, %113, %114, %115, %116, %117, %118 in 1 : vector<1x32xf32>, vector<1x32xf32>, vector<1x32xf32>, vector<1x32xf32>, vector<1x32xf32>, vector<1x32xf32>, vector<1x32xf32>, vector<1x32xf32> -> vector<1x256xf32>
    %c8 = arith.constant 8 : index
    %c0_21 = arith.constant 0 : index
    %120 = vector.load %arg5[%c8, %c0_21] : memref<16x256xf32, #tpu.memory_space<vmem>>, vector<1x256xf32>
    tpu.vector_store %arg5[%c8, %c0_21], %119 {strides = array<i32>} : memref<16x256xf32, #tpu.memory_space<vmem>>, vector<1x256xf32>,
    %121 = vector.extract_strided_slice %110 {offsets = [0, 32], sizes = [1, 32], strides = [1, 1]} : vector<8x64xf32> to vector<1x32xf32>
    %122 = vector.extract_strided_slice %110 {offsets = [1, 32], sizes = [1, 32], strides = [1, 1]} : vector<8x64xf32> to vector<1x32xf32>
    %123 = vector.extract_strided_slice %110 {offsets = [2, 32], sizes = [1, 32], strides = [1, 1]} : vector<8x64xf32> to vector<1x32xf32>
    %124 = vector.extract_strided_slice %110 {offsets = [3, 32], sizes = [1, 32], strides = [1, 1]} : vector<8x64xf32> to vector<1x32xf32>
    %125 = vector.extract_strided_slice %110 {offsets = [4, 32], sizes = [1, 32], strides = [1, 1]} : vector<8x64xf32> to vector<1x32xf32>
    %126 = vector.extract_strided_slice %110 {offsets = [5, 32], sizes = [1, 32], strides = [1, 1]} : vector<8x64xf32> to vector<1x32xf32>
    %127 = vector.extract_strided_slice %110 {offsets = [6, 32], sizes = [1, 32], strides = [1, 1]} : vector<8x64xf32> to vector<1x32xf32>
    %128 = vector.extract_strided_slice %110 {offsets = [7, 32], sizes = [1, 32], strides = [1, 1]} : vector<8x64xf32> to vector<1x32xf32>
    %129 = tpu.concatenate %121, %122, %123, %124, %125, %126, %127, %128 in 1 : vector<1x32xf32>, vector<1x32xf32>, vector<1x32xf32>, vector<1x32xf32>, vector<1x32xf32>, vector<1x32xf32>, vector<1x32xf32>, vector<1x32xf32> -> vector<1x256xf32>
    %c9 = arith.constant 9 : index
    %c0_22 = arith.constant 0 : index
    %130 = vector.load %arg5[%c9, %c0_22] : memref<16x256xf32, #tpu.memory_space<vmem>>, vector<1x256xf32>
    tpu.vector_store %arg5[%c9, %c0_22], %129 {strides = array<i32>} : memref<16x256xf32, #tpu.memory_space<vmem>>, vector<1x256xf32>,
    %131 = vector.extract_strided_slice %25 {offsets = [40, 0], sizes = [8, 64], strides = [1, 1]} : vector<64x64xf32> to vector<8x64xf32>
    %132 = vector.extract_strided_slice %131 {offsets = [0, 0], sizes = [1, 32], strides = [1, 1]} : vector<8x64xf32> to vector<1x32xf32>
    %133 = vector.extract_strided_slice %131 {offsets = [1, 0], sizes = [1, 32], strides = [1, 1]} : vector<8x64xf32> to vector<1x32xf32>
    %134 = vector.extract_strided_slice %131 {offsets = [2, 0], sizes = [1, 32], strides = [1, 1]} : vector<8x64xf32> to vector<1x32xf32>
    %135 = vector.extract_strided_slice %131 {offsets = [3, 0], sizes = [1, 32], strides = [1, 1]} : vector<8x64xf32> to vector<1x32xf32>
    %136 = vector.extract_strided_slice %131 {offsets = [4, 0], sizes = [1, 32], strides = [1, 1]} : vector<8x64xf32> to vector<1x32xf32>
    %137 = vector.extract_strided_slice %131 {offsets = [5, 0], sizes = [1, 32], strides = [1, 1]} : vector<8x64xf32> to vector<1x32xf32>
    %138 = vector.extract_strided_slice %131 {offsets = [6, 0], sizes = [1, 32], strides = [1, 1]} : vector<8x64xf32> to vector<1x32xf32>
    %139 = vector.extract_strided_slice %131 {offsets = [7, 0], sizes = [1, 32], strides = [1, 1]} : vector<8x64xf32> to vector<1x32xf32>
    %140 = tpu.concatenate %132, %133, %134, %135, %136, %137, %138, %139 in 1 : vector<1x32xf32>, vector<1x32xf32>, vector<1x32xf32>, vector<1x32xf32>, vector<1x32xf32>, vector<1x32xf32>, vector<1x32xf32>, vector<1x32xf32> -> vector<1x256xf32>
    %c10 = arith.constant 10 : index
    %c0_23 = arith.constant 0 : index
    %141 = vector.load %arg5[%c10, %c0_23] : memref<16x256xf32, #tpu.memory_space<vmem>>, vector<1x256xf32>
    tpu.vector_store %arg5[%c10, %c0_23], %140 {strides = array<i32>} : memref<16x256xf32, #tpu.memory_space<vmem>>, vector<1x256xf32>,
    %142 = vector.extract_strided_slice %131 {offsets = [0, 32], sizes = [1, 32], strides = [1, 1]} : vector<8x64xf32> to vector<1x32xf32>
    %143 = vector.extract_strided_slice %131 {offsets = [1, 32], sizes = [1, 32], strides = [1, 1]} : vector<8x64xf32> to vector<1x32xf32>
    %144 = vector.extract_strided_slice %131 {offsets = [2, 32], sizes = [1, 32], strides = [1, 1]} : vector<8x64xf32> to vector<1x32xf32>
    %145 = vector.extract_strided_slice %131 {offsets = [3, 32], sizes = [1, 32], strides = [1, 1]} : vector<8x64xf32> to vector<1x32xf32>
    %146 = vector.extract_strided_slice %131 {offsets = [4, 32], sizes = [1, 32], strides = [1, 1]} : vector<8x64xf32> to vector<1x32xf32>
    %147 = vector.extract_strided_slice %131 {offsets = [5, 32], sizes = [1, 32], strides = [1, 1]} : vector<8x64xf32> to vector<1x32xf32>
    %148 = vector.extract_strided_slice %131 {offsets = [6, 32], sizes = [1, 32], strides = [1, 1]} : vector<8x64xf32> to vector<1x32xf32>
    %149 = vector.extract_strided_slice %131 {offsets = [7, 32], sizes = [1, 32], strides = [1, 1]} : vector<8x64xf32> to vector<1x32xf32>
    %150 = tpu.concatenate %142, %143, %144, %145, %146, %147, %148, %149 in 1 : vector<1x32xf32>, vector<1x32xf32>, vector<1x32xf32>, vector<1x32xf32>, vector<1x32xf32>, vector<1x32xf32>, vector<1x32xf32>, vector<1x32xf32> -> vector<1x256xf32>
    %c11 = arith.constant 11 : index
    %c0_24 = arith.constant 0 : index
    %151 = vector.load %arg5[%c11, %c0_24] : memref<16x256xf32, #tpu.memory_space<vmem>>, vector<1x256xf32>
    tpu.vector_store %arg5[%c11, %c0_24], %150 {strides = array<i32>} : memref<16x256xf32, #tpu.memory_space<vmem>>, vector<1x256xf32>,
    %152 = vector.extract_strided_slice %25 {offsets = [48, 0], sizes = [8, 64], strides = [1, 1]} : vector<64x64xf32> to vector<8x64xf32>
    %153 = vector.extract_strided_slice %152 {offsets = [0, 0], sizes = [1, 32], strides = [1, 1]} : vector<8x64xf32> to vector<1x32xf32>
    %154 = vector.extract_strided_slice %152 {offsets = [1, 0], sizes = [1, 32], strides = [1, 1]} : vector<8x64xf32> to vector<1x32xf32>
    %155 = vector.extract_strided_slice %152 {offsets = [2, 0], sizes = [1, 32], strides = [1, 1]} : vector<8x64xf32> to vector<1x32xf32>
    %156 = vector.extract_strided_slice %152 {offsets = [3, 0], sizes = [1, 32], strides = [1, 1]} : vector<8x64xf32> to vector<1x32xf32>
    %157 = vector.extract_strided_slice %152 {offsets = [4, 0], sizes = [1, 32], strides = [1, 1]} : vector<8x64xf32> to vector<1x32xf32>
    %158 = vector.extract_strided_slice %152 {offsets = [5, 0], sizes = [1, 32], strides = [1, 1]} : vector<8x64xf32> to vector<1x32xf32>
    %159 = vector.extract_strided_slice %152 {offsets = [6, 0], sizes = [1, 32], strides = [1, 1]} : vector<8x64xf32> to vector<1x32xf32>
    %160 = vector.extract_strided_slice %152 {offsets = [7, 0], sizes = [1, 32], strides = [1, 1]} : vector<8x64xf32> to vector<1x32xf32>
    %161 = tpu.concatenate %153, %154, %155, %156, %157, %158, %159, %160 in 1 : vector<1x32xf32>, vector<1x32xf32>, vector<1x32xf32>, vector<1x32xf32>, vector<1x32xf32>, vector<1x32xf32>, vector<1x32xf32>, vector<1x32xf32> -> vector<1x256xf32>
    %c12 = arith.constant 12 : index
    %c0_25 = arith.constant 0 : index
    %162 = vector.load %arg5[%c12, %c0_25] : memref<16x256xf32, #tpu.memory_space<vmem>>, vector<1x256xf32>
    tpu.vector_store %arg5[%c12, %c0_25], %161 {strides = array<i32>} : memref<16x256xf32, #tpu.memory_space<vmem>>, vector<1x256xf32>,
    %163 = vector.extract_strided_slice %152 {offsets = [0, 32], sizes = [1, 32], strides = [1, 1]} : vector<8x64xf32> to vector<1x32xf32>
    %164 = vector.extract_strided_slice %152 {offsets = [1, 32], sizes = [1, 32], strides = [1, 1]} : vector<8x64xf32> to vector<1x32xf32>
    %165 = vector.extract_strided_slice %152 {offsets = [2, 32], sizes = [1, 32], strides = [1, 1]} : vector<8x64xf32> to vector<1x32xf32>
    %166 = vector.extract_strided_slice %152 {offsets = [3, 32], sizes = [1, 32], strides = [1, 1]} : vector<8x64xf32> to vector<1x32xf32>
    %167 = vector.extract_strided_slice %152 {offsets = [4, 32], sizes = [1, 32], strides = [1, 1]} : vector<8x64xf32> to vector<1x32xf32>
    %168 = vector.extract_strided_slice %152 {offsets = [5, 32], sizes = [1, 32], strides = [1, 1]} : vector<8x64xf32> to vector<1x32xf32>
    %169 = vector.extract_strided_slice %152 {offsets = [6, 32], sizes = [1, 32], strides = [1, 1]} : vector<8x64xf32> to vector<1x32xf32>
    %170 = vector.extract_strided_slice %152 {offsets = [7, 32], sizes = [1, 32], strides = [1, 1]} : vector<8x64xf32> to vector<1x32xf32>
    %171 = tpu.concatenate %163, %164, %165, %166, %167, %168, %169, %170 in 1 : vector<1x32xf32>, vector<1x32xf32>, vector<1x32xf32>, vector<1x32xf32>, vector<1x32xf32>, vector<1x32xf32>, vector<1x32xf32>, vector<1x32xf32> -> vector<1x256xf32>
    %c13 = arith.constant 13 : index
    %c0_26 = arith.constant 0 : index
    %172 = vector.load %arg5[%c13, %c0_26] : memref<16x256xf32, #tpu.memory_space<vmem>>, vector<1x256xf32>
    tpu.vector_store %arg5[%c13, %c0_26], %171 {strides = array<i32>} : memref<16x256xf32, #tpu.memory_space<vmem>>, vector<1x256xf32>,
    %173 = vector.extract_strided_slice %25 {offsets = [56, 0], sizes = [8, 64], strides = [1, 1]} : vector<64x64xf32> to vector<8x64xf32>
    %174 = vector.extract_strided_slice %173 {offsets = [0, 0], sizes = [1, 32], strides = [1, 1]} : vector<8x64xf32> to vector<1x32xf32>
    %175 = vector.extract_strided_slice %173 {offsets = [1, 0], sizes = [1, 32], strides = [1, 1]} : vector<8x64xf32> to vector<1x32xf32>
    %176 = vector.extract_strided_slice %173 {offsets = [2, 0], sizes = [1, 32], strides = [1, 1]} : vector<8x64xf32> to vector<1x32xf32>
    %177 = vector.extract_strided_slice %173 {offsets = [3, 0], sizes = [1, 32], strides = [1, 1]} : vector<8x64xf32> to vector<1x32xf32>
    %178 = vector.extract_strided_slice %173 {offsets = [4, 0], sizes = [1, 32], strides = [1, 1]} : vector<8x64xf32> to vector<1x32xf32>
    %179 = vector.extract_strided_slice %173 {offsets = [5, 0], sizes = [1, 32], strides = [1, 1]} : vector<8x64xf32> to vector<1x32xf32>
    %180 = vector.extract_strided_slice %173 {offsets = [6, 0], sizes = [1, 32], strides = [1, 1]} : vector<8x64xf32> to vector<1x32xf32>
    %181 = vector.extract_strided_slice %173 {offsets = [7, 0], sizes = [1, 32], strides = [1, 1]} : vector<8x64xf32> to vector<1x32xf32>
    %182 = tpu.concatenate %174, %175, %176, %177, %178, %179, %180, %181 in 1 : vector<1x32xf32>, vector<1x32xf32>, vector<1x32xf32>, vector<1x32xf32>, vector<1x32xf32>, vector<1x32xf32>, vector<1x32xf32>, vector<1x32xf32> -> vector<1x256xf32>
    %c14 = arith.constant 14 : index
    %c0_27 = arith.constant 0 : index
    %183 = vector.load %arg5[%c14, %c0_27] : memref<16x256xf32, #tpu.memory_space<vmem>>, vector<1x256xf32>
    tpu.vector_store %arg5[%c14, %c0_27], %182 {strides = array<i32>} : memref<16x256xf32, #tpu.memory_space<vmem>>, vector<1x256xf32>,
    %184 = vector.extract_strided_slice %173 {offsets = [0, 32], sizes = [1, 32], strides = [1, 1]} : vector<8x64xf32> to vector<1x32xf32>
    %185 = vector.extract_strided_slice %173 {offsets = [1, 32], sizes = [1, 32], strides = [1, 1]} : vector<8x64xf32> to vector<1x32xf32>
    %186 = vector.extract_strided_slice %173 {offsets = [2, 32], sizes = [1, 32], strides = [1, 1]} : vector<8x64xf32> to vector<1x32xf32>
    %187 = vector.extract_strided_slice %173 {offsets = [3, 32], sizes = [1, 32], strides = [1, 1]} : vector<8x64xf32> to vector<1x32xf32>
    %188 = vector.extract_strided_slice %173 {offsets = [4, 32], sizes = [1, 32], strides = [1, 1]} : vector<8x64xf32> to vector<1x32xf32>
    %189 = vector.extract_strided_slice %173 {offsets = [5, 32], sizes = [1, 32], strides = [1, 1]} : vector<8x64xf32> to vector<1x32xf32>
    %190 = vector.extract_strided_slice %173 {offsets = [6, 32], sizes = [1, 32], strides = [1, 1]} : vector<8x64xf32> to vector<1x32xf32>
    %191 = vector.extract_strided_slice %173 {offsets = [7, 32], sizes = [1, 32], strides = [1, 1]} : vector<8x64xf32> to vector<1x32xf32>
    %192 = tpu.concatenate %184, %185, %186, %187, %188, %189, %190, %191 in 1 : vector<1x32xf32>, vector<1x32xf32>, vector<1x32xf32>, vector<1x32xf32>, vector<1x32xf32>, vector<1x32xf32>, vector<1x32xf32>, vector<1x32xf32> -> vector<1x256xf32>
    %c15 = arith.constant 15 : index
    %c0_28 = arith.constant 0 : index
    %193 = vector.load %arg5[%c15, %c0_28] : memref<16x256xf32, #tpu.memory_space<vmem>>, vector<1x256xf32>
    tpu.vector_store %arg5[%c15, %c0_28], %192 {strides = array<i32>} : memref<16x256xf32, #tpu.memory_space<vmem>>, vector<1x256xf32>,
    return
  }
  func.func @transform_0(%arg0: i32) -> (i32, i32) {
    %c0_i32 = arith.constant 0 : i32
    %c0_i32_0 = arith.constant 0 : i32
    return %arg0, %c0_i32 : i32, i32
  }
  func.func @transform_1(%arg0: i32) -> (i32, i32) {
    %c0_i32 = arith.constant 0 : i32
    %c0_i32_0 = arith.constant 0 : i32
    %c0_i32_1 = arith.constant 0 : i32
    return %c0_i32, %c0_i32_0 : i32, i32
  }
  func.func @transform_2(%arg0: i32) -> (i32, i32) {
    %c0_i32 = arith.constant 0 : i32
    %c0_i32_0 = arith.constant 0 : i32
    %c0_i32_1 = arith.constant 0 : i32
    return %c0_i32, %c0_i32_0 : i32, i32
  }
  func.func @transform_3(%arg0: i32) -> (i32, i32) {
    %c0_i32 = arith.constant 0 : i32
    %c0_i32_0 = arith.constant 0 : i32
    %c0_i32_1 = arith.constant 0 : i32
    return %c0_i32, %c0_i32_0 : i32, i32
  }
  func.func @transform_4(%arg0: i32) -> (i32, i32) {
    %c0_i32 = arith.constant 0 : i32
    %c0_i32_0 = arith.constant 0 : i32
    return %arg0, %c0_i32 : i32, i32
  }
}

</mosaic_0001>

<llo_original>
// kernel: tpu_custom_call.1
$region0: #{tpu_custom_call.1}
  #allocation0 [shape = 'u32[]', space=smem, size = 0x4, offset = 0x4, fixed_abs, tag = 'smem constant byte address 0x4 - core index']
  #allocation1 [shape = 'u32[72,128]{1,0:T(1,128)}', space=vmem, size = 0x9000, scoped, tag = 'internal scratch']
  %s0 = inlined_call_operand.vmem [shape: f32[128,32], index: 0, kind: input, shape index: {}]
  %s1 = inlined_call_operand.vmem [shape: f32[1,32], index: 1, kind: input, shape index: {}]
  %s2 = inlined_call_operand.vmem [shape: f32[1,32], index: 2, kind: input, shape index: {}]
  %s3 = inlined_call_operand.vmem [shape: bf16[32,64], index: 3, kind: input, shape index: {}]
  %s4 = inlined_call_operand.hbm [shape: f32[32,256], index: 4, kind: output, shape index: {}]
  %s5 = sld [smem:[#allocation0]]
  $region49: #{tpu_custom_call.1} parent=0
    _
  %s7 = ssub.s32 1, %s5
  %s8 = scalar_select 0, %s7, %s5
  $region1: #{tpu_custom_call.1} parent=0
    #allocation2 [shape = 'u8[32768]{0}', space=vmem, size = 0x8000, scoped, tag = 'output window, operand 0']
    #allocation3 [shape = 's32[2]{0}', space=sflag, size = 0x8, scoped, tag = 'scoped memory for tpu_custom_call.1']
    %9 = vsyncpa [#allocation3], 0
    %s10 = scalar_lea.sflag [#allocation3], 1
    %11 = vsyncpa %s10, 0
    loop: start=0, step=1, limit=4
    $region2: #{tpu_custom_call.1} parent=1 // loop_pre_header
      _
    $region3: #{tpu_custom_call.1} parent=1 // loop_header
      %s13 = sphi 0, %s17
      %p14 = scmp.ge.s32.totalorder %s13, 4
      %s23 = sphi 0, %s25
      %s26 = sphi 0, %s23
      %s27 = sphi 0, %s26
      %s43 = sphi 0, %s27
      %s47 = sphi 0, %s47
      %s49 = sphi 0, %s47
      %s50 = sphi 0, %s49
      %s64 = sphi 0, %s50
      %s68 = sphi 0, %s68
      %s70 = sphi 0, %s68
      %s71 = sphi 0, %s70
      %s85 = sphi 0, %s71
      %s89 = sphi 0, %s89
      %s91 = sphi 0, %s89
      %s92 = sphi 0, %s91
      %s106 = sphi 0, %s92
      %s112 = sphi 0, %s114
      %s115 = sphi 0, %s112
      %s116 = sphi 0, %s115
      %s132 = sphi 0, %s116
    $region4: #{tpu_custom_call.1} parent=1 // loop_header_branch
      %16 = sbr.rel (%p14) target = $region8
    $region5: #{tpu_custom_call.1} parent=1 // loop_body
      %s18 = ssub.s32 %s13, 1
      %s19 = ssub.s32 %s13, 2
      %s20 = sadd.s32 %s13, 1
      %s21 = ssub.s32 %s13, %s20
      %p22 = scmp.eq.s32.totalorder %s21, 0
      %s24 = sadd.s32 %s23, 1
      %s25 = scalar_select %p22, %s23, %s24
      %p28 = pneg %p22
      %p29 = scmp.eq.s32.totalorder %s13, 1
      %p30 = por %p28, %p29
      %p31 = scmp.ne.s32.totalorder %s23, %s26
      %p32 = scmp.eq.s32.totalorder %s13, 0
      %p33 = por %p31, %p32
      %p34 = scmp.ne.s32.totalorder %s23, %s26
      %p35 = scmp.eq.s32.totalorder %s18, 1
      %p36 = por %p34, %p35
      %p37 = scmp.ne.s32.totalorder %s26, %s27
      %p38 = scmp.eq.s32.totalorder %s18, 0
      %p39 = por %p37, %p38
      %p40 = scmp.ne.s32.totalorder %s26, %s27
      %p41 = scmp.eq.s32.totalorder %s19, 1
      %p42 = por %p40, %p41
      %p44 = scmp.ne.s32.totalorder %s27, %s43
      %p45 = scmp.eq.s32.totalorder %s19, 0
      %p46 = por %p44, %p45
      %s48 = sadd.s32 %s47, 1
      %p51 = scmp.eq.s32.totalorder %s13, 1
      %p52 = scmp.ne.s32.totalorder %s47, %s49
      %p53 = scmp.eq.s32.totalorder %s13, 0
      %p54 = por %p52, %p53
      %p55 = scmp.ne.s32.totalorder %s47, %s49
      %p56 = scmp.eq.s32.totalorder %s18, 1
      %p57 = por %p55, %p56
      %p58 = scmp.ne.s32.totalorder %s49, %s50
      %p59 = scmp.eq.s32.totalorder %s18, 0
      %p60 = por %p58, %p59
      %p61 = scmp.ne.s32.totalorder %s49, %s50
      %p62 = scmp.eq.s32.totalorder %s19, 1
      %p63 = por %p61, %p62
      %p65 = scmp.ne.s32.totalorder %s50, %s64
      %p66 = scmp.eq.s32.totalorder %s19, 0
      %p67 = por %p65, %p66
      %s69 = sadd.s32 %s68, 1
      %p72 = scmp.eq.s32.totalorder %s13, 1
      %p73 = scmp.ne.s32.totalorder %s68, %s70
      %p74 = scmp.eq.s32.totalorder %s13, 0
      %p75 = por %p73, %p74
      %p76 = scmp.ne.s32.totalorder %s68, %s70
      %p77 = scmp.eq.s32.totalorder %s18, 1
      %p78 = por %p76, %p77
      %p79 = scmp.ne.s32.totalorder %s70, %s71
      %p80 = scmp.eq.s32.totalorder %s18, 0
      %p81 = por %p79, %p80
      %p82 = scmp.ne.s32.totalorder %s70, %s71
      %p83 = scmp.eq.s32.totalorder %s19, 1
      %p84 = por %p82, %p83
      %p86 = scmp.ne.s32.totalorder %s71, %s85
      %p87 = scmp.eq.s32.totalorder %s19, 0
      %p88 = por %p86, %p87
      %s90 = sadd.s32 %s89, 1
      %p93 = scmp.eq.s32.totalorder %s13, 1
      %p94 = scmp.ne.s32.totalorder %s89, %s91
      %p95 = scmp.eq.s32.totalorder %s13, 0
      %p96 = por %p94, %p95
      %p97 = scmp.ne.s32.totalorder %s89, %s91
      %p98 = scmp.eq.s32.totalorder %s18, 1
      %p99 = por %p97, %p98
      %p100 = scmp.ne.s32.totalorder %s91, %s92
      %p101 = scmp.eq.s32.totalorder %s18, 0
      %p102 = por %p100, %p101
      %p103 = scmp.ne.s32.totalorder %s91, %s92
      %p104 = scmp.eq.s32.totalorder %s19, 1
      %p105 = por %p103, %p104
      %p107 = scmp.ne.s32.totalorder %s92, %s106
      %p108 = scmp.eq.s32.totalorder %s19, 0
      %p109 = por %p107, %p108
      %s110 = ssub.s32 %s13, %s20
      %p111 = scmp.eq.s32.totalorder %s110, 0
      %s113 = sadd.s32 %s112, 1
      %s114 = scalar_select %p111, %s112, %s113
      %p117 = pneg %p111
      %p118 = scmp.eq.s32.totalorder %s13, 1
      %p119 = por %p117, %p118
      %p120 = scmp.ne.s32.totalorder %s112, %s115
      %p121 = scmp.eq.s32.totalorder %s13, 0
      %p122 = por %p120, %p121
      %p123 = scmp.ne.s32.totalorder %s112, %s115
      %p124 = scmp.eq.s32.totalorder %s18, 1
      %p125 = por %p123, %p124
      %p126 = scmp.ne.s32.totalorder %s115, %s116
      %p127 = scmp.eq.s32.totalorder %s18, 0
      %p128 = por %p126, %p127
      %p129 = scmp.ne.s32.totalorder %s115, %s116
      %p130 = scmp.eq.s32.totalorder %s19, 1
      %p131 = por %p129, %p130
      %p133 = scmp.ne.s32.totalorder %s116, %s132
      %p134 = scmp.eq.s32.totalorder %s19, 0
      %p135 = por %p133, %p134
      %p136 = scmp.le.s32.totalorder 1, %s13
      %p137 = scmp.lt.s32.totalorder %s13, 3
      %p138 = pnand %p136, %p137
      %p139 = pneg %p138
      // Predicated region
      $region9: #{tpu_custom_call.1} parent=5 // pred_check
        _
      $region10: #{tpu_custom_call.1} parent=5 // pred_check_branch
        %141 = sbr.rel (%p138) target = $region12
      $region11: #{tpu_custom_call.1} parent=5 // pred_region
        %s142 = ssub.s32 %s13, 1
        // Predicated region
        $region13: #{tpu_custom_call.1} parent=11 // pred_check
          %p143 = pneg %p60
        $region14: #{tpu_custom_call.1} parent=11 // pred_check_branch
          %145 = sbr.rel (%p143) target = $region16
        $region15: #{tpu_custom_call.1} parent=11 // pred_region
          _
        $region16: #{tpu_custom_call.1} parent=11 // pred_fallthru
          _
        // Predicated region
        $region17: #{tpu_custom_call.1} parent=11 // pred_check
          %p146 = pneg %p81
        $region18: #{tpu_custom_call.1} parent=11 // pred_check_branch
          %148 = sbr.rel (%p146) target = $region20
        $region19: #{tpu_custom_call.1} parent=11 // pred_region
          _
        $region20: #{tpu_custom_call.1} parent=11 // pred_fallthru
          _
        // Predicated region
        $region21: #{tpu_custom_call.1} parent=11 // pred_check
          %p149 = pneg %p102
        $region22: #{tpu_custom_call.1} parent=11 // pred_check_branch
          %151 = sbr.rel (%p149) target = $region24
        $region23: #{tpu_custom_call.1} parent=11 // pred_region
          _
        $region24: #{tpu_custom_call.1} parent=11 // pred_fallthru
          _
      $region12: #{tpu_custom_call.1} parent=5 // pred_fallthru
        _
      %p152 = scmp.lt.s32.totalorder %s13, 2
      // Predicated region
      $region25: #{tpu_custom_call.1} parent=5 // pred_check
        %p153 = pneg %p152
      $region26: #{tpu_custom_call.1} parent=5 // pred_check_branch
        %155 = sbr.rel (%p153) target = $region28
      $region27: #{tpu_custom_call.1} parent=5 // pred_region
        // Predicated region
        $region29: #{tpu_custom_call.1} parent=27 // pred_check
          %p156 = pneg %p33
        $region30: #{tpu_custom_call.1} parent=27 // pred_check_branch
          %158 = sbr.rel (%p156) target = $region32
        $region31: #{tpu_custom_call.1} parent=27 // pred_region
          %s159 = smul.u32 8, %s13
          %p160 = scmp.lt.s32.totalorder %s159, 15
          %s161 = scalar_select %p160, %s159, 15
          %s162 = smul.addr %s161, 8
          %s163 = scalar_lea.vmem %s0, %s162
          %s164 = smul.u32 8, %s13
        $region32: #{tpu_custom_call.1} parent=27 // pred_fallthru
          _
      $region28: #{tpu_custom_call.1} parent=5 // pred_fallthru
        _
      %p165 = scmp.le.s32.totalorder 1, %s13
      %p166 = scmp.lt.s32.totalorder %s13, 3
      %p167 = pnand %p165, %p166
      %p168 = pneg %p167
      // Predicated region
      $region33: #{tpu_custom_call.1} parent=5 // pred_check
        _
      $region34: #{tpu_custom_call.1} parent=5 // pred_check_branch
        %170 = sbr.rel (%p167) target = $region36
      $region35: #{tpu_custom_call.1} parent=5 // pred_region
        %s171 = ssub.s32 %s13, 1
        %s172 = smul.u32 8, %s18
        %p173 = scmp.lt.s32.totalorder %s172, 15
        %s174 = scalar_select %p173, %s172, 15
        %s175 = smul.addr %s174, 8
        %s176 = scalar_lea.vmem %s0, %s175
        %p177 = pneg %p39
        %p178 = pneg %p36
        %p179 = pneg %p60
        %p180 = pneg %p57
        %p181 = pneg %p81
        %p182 = pneg %p78
        %p183 = pneg %p102
        %p184 = pneg %p99
        %p185 = pneg %p128
        %p186 = pneg %p125
        %s187 = sand.u32 %s115, 1
        %s188 = scalar_lea.sflag [#allocation3], %s187
        %s189 = sand.u32 %s115, 1
        %s190 = smul.addr %s189, 32
        %s191 = scalar_lea.vmem [#allocation2], %s190
        %s192 = smul.u32 8, %s18
        %p193 = scmp.lt.s32.totalorder %s192, 15
        %s194 = scalar_select %p193, %s192, 15
        %s195 = smul.addr %s194, 8
        %s196 = scalar_lea.vmem %s0, %s195
        %s197 = smul.u32 8, %s18
        %s198 = smul.u32 2, %s18
        %v200 = vld [vmem:[%s196] sm:$0xff]
        %v201 = vld [vmem:[%s196 + $0x8] sm:$0xff]
        %v202 = vld [vmem:[%s196 + $0x10] sm:$0xff]
        %v203 = vld [vmem:[%s196 + $0x18] sm:$0xff]
        %v204 = vld [vmem:[%s196 + $0x20] sm:$0xff]
        %v205 = vld [vmem:[%s196 + $0x28] sm:$0xff]
        %v206 = vld [vmem:[%s196 + $0x30] sm:$0xff]
        %v207 = vld [vmem:[%s196 + $0x38] sm:$0xff]
        %vm208 = vcmask 261120
        %v209 = vsel %vm208, %v200, 0.0
        %210 = vadd.xlane.f32.xlu0 %v209
        %v211 = vpop.xlane.xlu0 %210
        %v212 = vsel %vm208, %v201, 0.0
        %213 = vadd.xlane.f32.xlu0 %v212
        %v214 = vpop.xlane.xlu0 %213
        %v215 = vsel %vm208, %v202, 0.0
        %216 = vadd.xlane.f32.xlu0 %v215
        %v217 = vpop.xlane.xlu0 %216
        %v218 = vsel %vm208, %v203, 0.0
        %219 = vadd.xlane.f32.xlu0 %v218
        %v220 = vpop.xlane.xlu0 %219
        %v221 = vsel %vm208, %v204, 0.0
        %222 = vadd.xlane.f32.xlu0 %v221
        %v223 = vpop.xlane.xlu0 %222
        %v224 = vsel %vm208, %v205, 0.0
        %225 = vadd.xlane.f32.xlu0 %v224
        %v226 = vpop.xlane.xlu0 %225
        %v227 = vsel %vm208, %v206, 0.0
        %228 = vadd.xlane.f32.xlu0 %v227
        %v229 = vpop.xlane.xlu0 %228
        %v230 = vsel %vm208, %v207, 0.0
        %231 = vadd.xlane.f32.xlu0 %v230
        %v232 = vpop.xlane.xlu0 %231
        %v233 = vrcp.pop 32.0
        %v234 = vmul.f32 32.0, %v233
        %v235 = vsub.f32 1.0, %v234
        %v236 = vmul.f32 %v233, %v235
        %v237 = vadd.f32 %v233, %v236
        %vm238 = vweird.f32 %v233
        %v239 = vsel %vm238, %v233, %v237
        %v240 = vmul.f32 %v211, %v239
        %v241 = vmul.f32 %v214, %v239
        %v242 = vmul.f32 %v217, %v239
        %v243 = vmul.f32 %v220, %v239
        %v244 = vmul.f32 %v223, %v239
        %v245 = vmul.f32 %v226, %v239
        %v246 = vmul.f32 %v229, %v239
        %v247 = vmul.f32 %v232, %v239
        %v248 = vsub.f32 %v200, %v240
        %v249 = vsub.f32 %v201, %v241
        %v250 = vsub.f32 %v202, %v242
        %v251 = vsub.f32 %v203, %v243
        %v252 = vsub.f32 %v204, %v244
        %v253 = vsub.f32 %v205, %v245
        %v254 = vsub.f32 %v206, %v246
        %v255 = vsub.f32 %v207, %v247
        %v256 = vmul.f32 %v248, %v248
        %v257 = vmul.f32 %v249, %v249
        %v258 = vmul.f32 %v250, %v250
        %v259 = vmul.f32 %v251, %v251
        %v260 = vmul.f32 %v252, %v252
        %v261 = vmul.f32 %v253, %v253
        %v262 = vmul.f32 %v254, %v254
        %v263 = vmul.f32 %v255, %v255
        %v264 = vsel %vm208, %v256, 0.0
        %265 = vadd.xlane.f32.xlu0 %v264
        %v266 = vpop.xlane.xlu0 %265
        %v267 = vsel %vm208, %v257, 0.0
        %268 = vadd.xlane.f32.xlu0 %v267
        %v269 = vpop.xlane.xlu0 %268
        %v270 = vsel %vm208, %v258, 0.0
        %271 = vadd.xlane.f32.xlu0 %v270
        %v272 = vpop.xlane.xlu0 %271
        %v273 = vsel %vm208, %v259, 0.0
        %274 = vadd.xlane.f32.xlu0 %v273
        %v275 = vpop.xlane.xlu0 %274
        %v276 = vsel %vm208, %v260, 0.0
        %277 = vadd.xlane.f32.xlu0 %v276
        %v278 = vpop.xlane.xlu0 %277
        %v279 = vsel %vm208, %v261, 0.0
        %280 = vadd.xlane.f32.xlu0 %v279
        %v281 = vpop.xlane.xlu0 %280
        %v282 = vsel %vm208, %v262, 0.0
        %283 = vadd.xlane.f32.xlu0 %v282
        %v284 = vpop.xlane.xlu0 %283
        %v285 = vsel %vm208, %v263, 0.0
        %286 = vadd.xlane.f32.xlu0 %v285
        %v287 = vpop.xlane.xlu0 %286
        %v288 = vmul.f32 %v266, %v239
        %v289 = vmul.f32 %v269, %v239
        %v290 = vmul.f32 %v272, %v239
        %v291 = vmul.f32 %v275, %v239
        %v292 = vmul.f32 %v278, %v239
        %v293 = vmul.f32 %v281, %v239
        %v294 = vmul.f32 %v284, %v239
        %v295 = vmul.f32 %v287, %v239
        %v296 = vadd.f32 %v288, 1e-05
        %v297 = vadd.f32 %v289, 1e-05
        %v298 = vadd.f32 %v290, 1e-05
        %v299 = vadd.f32 %v291, 1e-05
        %v300 = vadd.f32 %v292, 1e-05
        %v301 = vadd.f32 %v293, 1e-05
        %v302 = vadd.f32 %v294, 1e-05
        %v303 = vadd.f32 %v295, 1e-05
        %v304 = vrsqrt.pop %v296
        %v305 = vmul.f32 %v304, %v296
        %v306 = vmul.f32 %v305, %v304
        %v307 = vmul.f32 0.5, %v306
        %v308 = vsub.f32 1.5, %v307
        %v309 = vmul.f32 %v304, %v308
        %vm310 = vweird.f32 %v296
        %vm311 = vweird.f32 %v304
        %vm312 = vmor %vm310, %vm311
        %v313 = vsel %vm312, %v304, %v309
        %v314 = vrsqrt.pop %v297
        %v315 = vmul.f32 %v314, %v297
        %v316 = vmul.f32 %v315, %v314
        %v317 = vmul.f32 0.5, %v316
        %v318 = vsub.f32 1.5, %v317
        %v319 = vmul.f32 %v314, %v318
        %vm320 = vweird.f32 %v297
        %vm321 = vweird.f32 %v314
        %vm322 = vmor %vm320, %vm321
        %v323 = vsel %vm322, %v314, %v319
        %v324 = vrsqrt.pop %v298
        %v325 = vmul.f32 %v324, %v298
        %v326 = vmul.f32 %v325, %v324
        %v327 = vmul.f32 0.5, %v326
        %v328 = vsub.f32 1.5, %v327
        %v329 = vmul.f32 %v324, %v328
        %vm330 = vweird.f32 %v298
        %vm331 = vweird.f32 %v324
        %vm332 = vmor %vm330, %vm331
        %v333 = vsel %vm332, %v324, %v329
        %v334 = vrsqrt.pop %v299
        %v335 = vmul.f32 %v334, %v299
        %v336 = vmul.f32 %v335, %v334
        %v337 = vmul.f32 0.5, %v336
        %v338 = vsub.f32 1.5, %v337
        %v339 = vmul.f32 %v334, %v338
        %vm340 = vweird.f32 %v299
        %vm341 = vweird.f32 %v334
        %vm342 = vmor %vm340, %vm341
        %v343 = vsel %vm342, %v334, %v339
        %v344 = vrsqrt.pop %v300
        %v345 = vmul.f32 %v344, %v300
        %v346 = vmul.f32 %v345, %v344
        %v347 = vmul.f32 0.5, %v346
        %v348 = vsub.f32 1.5, %v347
        %v349 = vmul.f32 %v344, %v348
        %vm350 = vweird.f32 %v300
        %vm351 = vweird.f32 %v344
        %vm352 = vmor %vm350, %vm351
        %v353 = vsel %vm352, %v344, %v349
        %v354 = vrsqrt.pop %v301
        %v355 = vmul.f32 %v354, %v301
        %v356 = vmul.f32 %v355, %v354
        %v357 = vmul.f32 0.5, %v356
        %v358 = vsub.f32 1.5, %v357
        %v359 = vmul.f32 %v354, %v358
        %vm360 = vweird.f32 %v301
        %vm361 = vweird.f32 %v354
        %vm362 = vmor %vm360, %vm361
        %v363 = vsel %vm362, %v354, %v359
        %v364 = vrsqrt.pop %v302
        %v365 = vmul.f32 %v364, %v302
        %v366 = vmul.f32 %v365, %v364
        %v367 = vmul.f32 0.5, %v366
        %v368 = vsub.f32 1.5, %v367
        %v369 = vmul.f32 %v364, %v368
        %vm370 = vweird.f32 %v302
        %vm371 = vweird.f32 %v364
        %vm372 = vmor %vm370, %vm371
        %v373 = vsel %vm372, %v364, %v369
        %v374 = vrsqrt.pop %v303
        %v375 = vmul.f32 %v374, %v303
        %v376 = vmul.f32 %v375, %v374
        %v377 = vmul.f32 0.5, %v376
        %v378 = vsub.f32 1.5, %v377
        %v379 = vmul.f32 %v374, %v378
        %vm380 = vweird.f32 %v303
        %vm381 = vweird.f32 %v374
        %vm382 = vmor %vm380, %vm381
        %v383 = vsel %vm382, %v374, %v379
        %v384 = vmul.f32 %v248, %v313
        %v385 = vmul.f32 %v249, %v323
        %v386 = vmul.f32 %v250, %v333
        %v387 = vmul.f32 %v251, %v343
        %v388 = vmul.f32 %v252, %v353
        %v389 = vmul.f32 %v253, %v363
        %v390 = vmul.f32 %v254, %v373
        %v391 = vmul.f32 %v255, %v383
        %v392 = vld [vmem:[%s1] sm:$0x1]
        %v394 = vperm.slane %v392, 0
        %v396 = vmul.f32 %v384, %v394
        %v397 = vmul.f32 %v385, %v394
        %v398 = vmul.f32 %v386, %v394
        %v399 = vmul.f32 %v387, %v394
        %v400 = vmul.f32 %v388, %v394
        %v401 = vmul.f32 %v389, %v394
        %v402 = vmul.f32 %v390, %v394
        %v403 = vmul.f32 %v391, %v394
        %v404 = vld [vmem:[%s2] sm:$0x1]
        %v406 = vperm.slane %v404, 0
        %v408 = vadd.f32 %v396, %v406
        %v409 = vadd.f32 %v397, %v406
        %v410 = vadd.f32 %v398, %v406
        %v411 = vadd.f32 %v399, %v406
        %v412 = vadd.f32 %v400, %v406
        %v413 = vadd.f32 %v401, %v406
        %v414 = vadd.f32 %v402, %v406
        %v415 = vadd.f32 %v403, %v406
        %v416 = vpack.c.bf16 %v409, %v408
        %v417 = vpack.c.bf16 %v411, %v410
        %v418 = vpack.c.bf16 %v413, %v412
        %v419 = vpack.c.bf16 %v415, %v414
        %v420 = vld [vmem:[%s3] sm:$0xf]
        %v421 = vld [vmem:[%s3 + $0x4] sm:$0xf]
        %v422 = vld [vmem:[%s3 + $0x8] sm:$0xf]
        %v423 = vld [vmem:[%s3 + $0xc] sm:$0xf]
        %v428 = vunpack.c.l.b16 %v420
        %v429 = vunpack.c.l.b16 %v421
        %v430 = vunpack.c.l.b16 %v422
        %v431 = vunpack.c.l.b16 %v423
        %v432 = vpack.c.b16 %v429, %v428
        %v433 = vpack.c.b16 %v431, %v430
        %v437 = vsel %vm208, %v416, 0
        %v440 = vsel %vm208, %v417, 0
        %v443 = vsel %vm208, %v418, 0
        %v446 = vsel %vm208, %v419, 0
        %448 = vmatpush.bf16.msra.mxu0 0
        %449 = vmatpush.bf16.msra.mxu0 0
        %450 = vmatpush.bf16.msra.mxu0 0
        %451 = vmatpush.bf16.msra.mxu0 0
        %452 = vmatpush.bf16.msra.mxu0 0
        %453 = vmatpush.bf16.msra.mxu0 0
        %454 = vmatpush.bf16.msra.mxu0 %v433
        %455 = vmatpush.bf16.msra.mxu0 %v432
        %456 = vmatmul.bf16.gmra.mxu0 %v437
        %v457 = vpop.f32.mrf.mxu0
        %v458 = vadd.f32 0.0, %v457
        %v459 = vpop.f32.mrf.mxu0
        %v460 = vadd.f32 0.0, %v459
        %461 = vmatmul.bf16.gmra.mxu0 %v440
        %v462 = vpop.f32.mrf.mxu0
        %v463 = vadd.f32 0.0, %v462
        %v464 = vpop.f32.mrf.mxu0
        %v465 = vadd.f32 0.0, %v464
        %466 = vmatmul.bf16.gmra.mxu0 %v443
        %v467 = vpop.f32.mrf.mxu0
        %v468 = vadd.f32 0.0, %v467
        %v469 = vpop.f32.mrf.mxu0
        %v470 = vadd.f32 0.0, %v469
        %471 = vmatmul.bf16.gmra.mxu0 %v446
        %v472 = vpop.f32.mrf.mxu0
        %v473 = vadd.f32 0.0, %v472
        %v474 = vpop.f32.mrf.mxu0
        %v475 = vadd.f32 0.0, %v474
        %476 = vdwg.mxu0
        %v478 = vrot.slane %v458, 1
        %479 = vrot.lane.b32.xlu0 %v478, 32
        %v480 = vpop.permute.xlu0 %479
        %v482 = vrot.slane %v458, 2
        %483 = vrot.lane.b32.xlu0 %v482, 64
        %v484 = vpop.permute.xlu0 %483
        %v486 = vrot.slane %v458, 3
        %487 = vrot.lane.b32.xlu0 %v486, 96
        %v488 = vpop.permute.xlu0 %487
        %v490 = vrot.slane %v458, 4
        %v492 = vrot.slane %v458, 5
        %493 = vrot.lane.b32.xlu0 %v492, 32
        %v494 = vpop.permute.xlu0 %493
        %v496 = vrot.slane %v458, 6
        %497 = vrot.lane.b32.xlu0 %v496, 64
        %v498 = vpop.permute.xlu0 %497
        %v500 = vrot.slane %v458, 7
        %501 = vrot.lane.b32.xlu0 %v500, 96
        %v502 = vpop.permute.xlu0 %501
        %v504 = vsel %vm208, %v458, %v480
        %vm505 = vcmask 523264
        %v506 = vsel %vm505, %v504, %v484
        %vm507 = vcmask 785408
        %v508 = vsel %vm507, %v506, %v488
        %v509 = vsel %vm208, %v490, %v494
        %v510 = vsel %vm505, %v509, %v498
        %v511 = vsel %vm507, %v510, %v502
        %v514 = vrot.slane %v511, 7
        %vm515 = vcmask 1040384
        %v516 = vsel %vm515, %v508, %v514
        %v518 = vlaneseq
        %vm519 = vcmp.ge.s32.totalorder %v518, 0
        %vm520 = vcmp.lt.s32.totalorder %v518, 256
        %vm521 = vmand %vm519, %vm520
        %522 = vst.msk [vmem:[%s191] ss:$8 sm:$0x3] %vm521, %v516
        %523 = vst.msk [vmem:[%s191] ss:$8 sm:$0x0] %vm521, %v516
        %524 = vrot.lane.b32.xlu0 %v458, 96
        %v525 = vpop.permute.xlu0 %524
        %528 = vrot.lane.b32.xlu0 %v482, 32
        %v529 = vpop.permute.xlu0 %528
        %531 = vrot.lane.b32.xlu0 %v486, 64
        %v532 = vpop.permute.xlu0 %531
        %534 = vrot.lane.b32.xlu0 %v490, 96
        %v535 = vpop.permute.xlu0 %534
        %538 = vrot.lane.b32.xlu0 %v496, 32
        %v539 = vpop.permute.xlu0 %538
        %541 = vrot.lane.b32.xlu0 %v500, 64
        %v542 = vpop.permute.xlu0 %541
        %v544 = vsel %vm208, %v525, %v478
        %v545 = vsel %vm505, %v544, %v529
        %v546 = vsel %vm507, %v545, %v532
        %v547 = vsel %vm208, %v535, %v492
        %v548 = vsel %vm505, %v547, %v539
        %v549 = vsel %vm507, %v548, %v542
        %v552 = vrot.slane %v549, 7
        %v553 = vsel %vm515, %v546, %v552
        %s555 = scalar_lea.vmem %s191, 1 [#allocation2]
        %556 = vst.msk [vmem:[%s555] ss:$8 sm:$0x3] %vm521, %v553
        %557 = vst.msk [vmem:[%s555] ss:$8 sm:$0x0] %vm521, %v553
        %v559 = vrot.slane %v460, 1
        %560 = vrot.lane.b32.xlu0 %v559, 32
        %v561 = vpop.permute.xlu0 %560
        %v563 = vrot.slane %v460, 2
        %564 = vrot.lane.b32.xlu0 %v563, 64
        %v565 = vpop.permute.xlu0 %564
        %v567 = vrot.slane %v460, 3
        %568 = vrot.lane.b32.xlu0 %v567, 96
        %v569 = vpop.permute.xlu0 %568
        %v571 = vrot.slane %v460, 4
        %v573 = vrot.slane %v460, 5
        %574 = vrot.lane.b32.xlu0 %v573, 32
        %v575 = vpop.permute.xlu0 %574
        %v577 = vrot.slane %v460, 6
        %578 = vrot.lane.b32.xlu0 %v577, 64
        %v579 = vpop.permute.xlu0 %578
        %v581 = vrot.slane %v460, 7
        %582 = vrot.lane.b32.xlu0 %v581, 96
        %v583 = vpop.permute.xlu0 %582
        %v585 = vsel %vm208, %v460, %v561
        %v586 = vsel %vm505, %v585, %v565
        %v587 = vsel %vm507, %v586, %v569
        %v588 = vsel %vm208, %v571, %v575
        %v589 = vsel %vm505, %v588, %v579
        %v590 = vsel %vm507, %v589, %v583
        %v593 = vrot.slane %v590, 7
        %v594 = vsel %vm515, %v587, %v593
        %s596 = scalar_lea.vmem %s191, 2 [#allocation2]
        %597 = vst.msk [vmem:[%s596] ss:$8 sm:$0x3] %vm521, %v594
        %598 = vst.msk [vmem:[%s596] ss:$8 sm:$0x0] %vm521, %v594
        %599 = vrot.lane.b32.xlu0 %v460, 96
        %v600 = vpop.permute.xlu0 %599
        %603 = vrot.lane.b32.xlu0 %v563, 32
        %v604 = vpop.permute.xlu0 %603
        %606 = vrot.lane.b32.xlu0 %v567, 64
        %v607 = vpop.permute.xlu0 %606
        %609 = vrot.lane.b32.xlu0 %v571, 96
        %v610 = vpop.permute.xlu0 %609
        %613 = vrot.lane.b32.xlu0 %v577, 32
        %v614 = vpop.permute.xlu0 %613
        %616 = vrot.lane.b32.xlu0 %v581, 64
        %v617 = vpop.permute.xlu0 %616
        %v619 = vsel %vm208, %v600, %v559
        %v620 = vsel %vm505, %v619, %v604
        %v621 = vsel %vm507, %v620, %v607
        %v622 = vsel %vm208, %v610, %v573
        %v623 = vsel %vm505, %v622, %v614
        %v624 = vsel %vm507, %v623, %v617
        %v627 = vrot.slane %v624, 7
        %v628 = vsel %vm515, %v621, %v627
        %s630 = scalar_lea.vmem %s191, 3 [#allocation2]
        %631 = vst.msk [vmem:[%s630] ss:$8 sm:$0x3] %vm521, %v628
        %632 = vst.msk [vmem:[%s630] ss:$8 sm:$0x0] %vm521, %v628
        %v634 = vrot.slane %v463, 1
        %635 = vrot.lane.b32.xlu0 %v634, 32
        %v636 = vpop.permute.xlu0 %635
        %v638 = vrot.slane %v463, 2
        %639 = vrot.lane.b32.xlu0 %v638, 64
        %v640 = vpop.permute.xlu0 %639
        %v642 = vrot.slane %v463, 3
        %643 = vrot.lane.b32.xlu0 %v642, 96
        %v644 = vpop.permute.xlu0 %643
        %v646 = vrot.slane %v463, 4
        %v648 = vrot.slane %v463, 5
        %649 = vrot.lane.b32.xlu0 %v648, 32
        %v650 = vpop.permute.xlu0 %649
        %v652 = vrot.slane %v463, 6
        %653 = vrot.lane.b32.xlu0 %v652, 64
        %v654 = vpop.permute.xlu0 %653
        %v656 = vrot.slane %v463, 7
        %657 = vrot.lane.b32.xlu0 %v656, 96
        %v658 = vpop.permute.xlu0 %657
        %v660 = vsel %vm208, %v463, %v636
        %v661 = vsel %vm505, %v660, %v640
        %v662 = vsel %vm507, %v661, %v644
        %v663 = vsel %vm208, %v646, %v650
        %v664 = vsel %vm505, %v663, %v654
        %v665 = vsel %vm507, %v664, %v658
        %v668 = vrot.slane %v665, 7
        %v669 = vsel %vm515, %v662, %v668
        %s671 = scalar_lea.vmem %s191, 4 [#allocation2]
        %672 = vst.msk [vmem:[%s671] ss:$8 sm:$0x3] %vm521, %v669
        %673 = vst.msk [vmem:[%s671] ss:$8 sm:$0x0] %vm521, %v669
        %674 = vrot.lane.b32.xlu0 %v463, 96
        %v675 = vpop.permute.xlu0 %674
        %678 = vrot.lane.b32.xlu0 %v638, 32
        %v679 = vpop.permute.xlu0 %678
        %681 = vrot.lane.b32.xlu0 %v642, 64
        %v682 = vpop.permute.xlu0 %681
        %684 = vrot.lane.b32.xlu0 %v646, 96
        %v685 = vpop.permute.xlu0 %684
        %688 = vrot.lane.b32.xlu0 %v652, 32
        %v689 = vpop.permute.xlu0 %688
        %691 = vrot.lane.b32.xlu0 %v656, 64
        %v692 = vpop.permute.xlu0 %691
        %v694 = vsel %vm208, %v675, %v634
        %v695 = vsel %vm505, %v694, %v679
        %v696 = vsel %vm507, %v695, %v682
        %v697 = vsel %vm208, %v685, %v648
        %v698 = vsel %vm505, %v697, %v689
        %v699 = vsel %vm507, %v698, %v692
        %v702 = vrot.slane %v699, 7
        %v703 = vsel %vm515, %v696, %v702
        %s705 = scalar_lea.vmem %s191, 5 [#allocation2]
        %706 = vst.msk [vmem:[%s705] ss:$8 sm:$0x3] %vm521, %v703
        %707 = vst.msk [vmem:[%s705] ss:$8 sm:$0x0] %vm521, %v703
        %v709 = vrot.slane %v465, 1
        %710 = vrot.lane.b32.xlu0 %v709, 32
        %v711 = vpop.permute.xlu0 %710
        %v713 = vrot.slane %v465, 2
        %714 = vrot.lane.b32.xlu0 %v713, 64
        %v715 = vpop.permute.xlu0 %714
        %v717 = vrot.slane %v465, 3
        %718 = vrot.lane.b32.xlu0 %v717, 96
        %v719 = vpop.permute.xlu0 %718
        %v721 = vrot.slane %v465, 4
        %v723 = vrot.slane %v465, 5
        %724 = vrot.lane.b32.xlu0 %v723, 32
        %v725 = vpop.permute.xlu0 %724
        %v727 = vrot.slane %v465, 6
        %728 = vrot.lane.b32.xlu0 %v727, 64
        %v729 = vpop.permute.xlu0 %728
        %v731 = vrot.slane %v465, 7
        %732 = vrot.lane.b32.xlu0 %v731, 96
        %v733 = vpop.permute.xlu0 %732
        %v735 = vsel %vm208, %v465, %v711
        %v736 = vsel %vm505, %v735, %v715
        %v737 = vsel %vm507, %v736, %v719
        %v738 = vsel %vm208, %v721, %v725
        %v739 = vsel %vm505, %v738, %v729
        %v740 = vsel %vm507, %v739, %v733
        %v743 = vrot.slane %v740, 7
        %v744 = vsel %vm515, %v737, %v743
        %s746 = scalar_lea.vmem %s191, 6 [#allocation2]
        %747 = vst.msk [vmem:[%s746] ss:$8 sm:$0x3] %vm521, %v744
        %748 = vst.msk [vmem:[%s746] ss:$8 sm:$0x0] %vm521, %v744
        %749 = vrot.lane.b32.xlu0 %v465, 96
        %v750 = vpop.permute.xlu0 %749
        %753 = vrot.lane.b32.xlu0 %v713, 32
        %v754 = vpop.permute.xlu0 %753
        %756 = vrot.lane.b32.xlu0 %v717, 64
        %v757 = vpop.permute.xlu0 %756
        %759 = vrot.lane.b32.xlu0 %v721, 96
        %v760 = vpop.permute.xlu0 %759
        %763 = vrot.lane.b32.xlu0 %v727, 32
        %v764 = vpop.permute.xlu0 %763
        %766 = vrot.lane.b32.xlu0 %v731, 64
        %v767 = vpop.permute.xlu0 %766
        %v769 = vsel %vm208, %v750, %v709
        %v770 = vsel %vm505, %v769, %v754
        %v771 = vsel %vm507, %v770, %v757
        %v772 = vsel %vm208, %v760, %v723
        %v773 = vsel %vm505, %v772, %v764
        %v774 = vsel %vm507, %v773, %v767
        %v777 = vrot.slane %v774, 7
        %v778 = vsel %vm515, %v771, %v777
        %s780 = scalar_lea.vmem %s191, 7 [#allocation2]
        %781 = vst.msk [vmem:[%s780] ss:$8 sm:$0x3] %vm521, %v778
        %782 = vst.msk [vmem:[%s780] ss:$8 sm:$0x0] %vm521, %v778
        %v784 = vrot.slane %v468, 1
        %785 = vrot.lane.b32.xlu0 %v784, 32
        %v786 = vpop.permute.xlu0 %785
        %v788 = vrot.slane %v468, 2
        %789 = vrot.lane.b32.xlu0 %v788, 64
        %v790 = vpop.permute.xlu0 %789
        %v792 = vrot.slane %v468, 3
        %793 = vrot.lane.b32.xlu0 %v792, 96
        %v794 = vpop.permute.xlu0 %793
        %v796 = vrot.slane %v468, 4
        %v798 = vrot.slane %v468, 5
        %799 = vrot.lane.b32.xlu0 %v798, 32
        %v800 = vpop.permute.xlu0 %799
        %v802 = vrot.slane %v468, 6
        %803 = vrot.lane.b32.xlu0 %v802, 64
        %v804 = vpop.permute.xlu0 %803
        %v806 = vrot.slane %v468, 7
        %807 = vrot.lane.b32.xlu0 %v806, 96
        %v808 = vpop.permute.xlu0 %807
        %v810 = vsel %vm208, %v468, %v786
        %v811 = vsel %vm505, %v810, %v790
        %v812 = vsel %vm507, %v811, %v794
        %v813 = vsel %vm208, %v796, %v800
        %v814 = vsel %vm505, %v813, %v804
        %v815 = vsel %vm507, %v814, %v808
        %v818 = vrot.slane %v815, 7
        %v819 = vsel %vm515, %v812, %v818
        %s821 = scalar_lea.vmem %s191, 16 [#allocation2]
        %822 = vst.msk [vmem:[%s821] ss:$8 sm:$0x3] %vm521, %v819
        %823 = vst.msk [vmem:[%s821] ss:$8 sm:$0x0] %vm521, %v819
        %824 = vrot.lane.b32.xlu0 %v468, 96
        %v825 = vpop.permute.xlu0 %824
        %828 = vrot.lane.b32.xlu0 %v788, 32
        %v829 = vpop.permute.xlu0 %828
        %831 = vrot.lane.b32.xlu0 %v792, 64
        %v832 = vpop.permute.xlu0 %831
        %834 = vrot.lane.b32.xlu0 %v796, 96
        %v835 = vpop.permute.xlu0 %834
        %838 = vrot.lane.b32.xlu0 %v802, 32
        %v839 = vpop.permute.xlu0 %838
        %841 = vrot.lane.b32.xlu0 %v806, 64
        %v842 = vpop.permute.xlu0 %841
        %v844 = vsel %vm208, %v825, %v784
        %v845 = vsel %vm505, %v844, %v829
        %v846 = vsel %vm507, %v845, %v832
        %v847 = vsel %vm208, %v835, %v798
        %v848 = vsel %vm505, %v847, %v839
        %v849 = vsel %vm507, %v848, %v842
        %v852 = vrot.slane %v849, 7
        %v853 = vsel %vm515, %v846, %v852
        %s855 = scalar_lea.vmem %s191, 17 [#allocation2]
        %856 = vst.msk [vmem:[%s855] ss:$8 sm:$0x3] %vm521, %v853
        %857 = vst.msk [vmem:[%s855] ss:$8 sm:$0x0] %vm521, %v853
        %v859 = vrot.slane %v470, 1
        %860 = vrot.lane.b32.xlu0 %v859, 32
        %v861 = vpop.permute.xlu0 %860
        %v863 = vrot.slane %v470, 2
        %864 = vrot.lane.b32.xlu0 %v863, 64
        %v865 = vpop.permute.xlu0 %864
        %v867 = vrot.slane %v470, 3
        %868 = vrot.lane.b32.xlu0 %v867, 96
        %v869 = vpop.permute.xlu0 %868
        %v871 = vrot.slane %v470, 4
        %v873 = vrot.slane %v470, 5
        %874 = vrot.lane.b32.xlu0 %v873, 32
        %v875 = vpop.permute.xlu0 %874
        %v877 = vrot.slane %v470, 6
        %878 = vrot.lane.b32.xlu0 %v877, 64
        %v879 = vpop.permute.xlu0 %878
        %v881 = vrot.slane %v470, 7
        %882 = vrot.lane.b32.xlu0 %v881, 96
        %v883 = vpop.permute.xlu0 %882
        %v885 = vsel %vm208, %v470, %v861
        %v886 = vsel %vm505, %v885, %v865
        %v887 = vsel %vm507, %v886, %v869
        %v888 = vsel %vm208, %v871, %v875
        %v889 = vsel %vm505, %v888, %v879
        %v890 = vsel %vm507, %v889, %v883
        %v893 = vrot.slane %v890, 7
        %v894 = vsel %vm515, %v887, %v893
        %s896 = scalar_lea.vmem %s191, 18 [#allocation2]
        %897 = vst.msk [vmem:[%s896] ss:$8 sm:$0x3] %vm521, %v894
        %898 = vst.msk [vmem:[%s896] ss:$8 sm:$0x0] %vm521, %v894
        %899 = vrot.lane.b32.xlu0 %v470, 96
        %v900 = vpop.permute.xlu0 %899
        %903 = vrot.lane.b32.xlu0 %v863, 32
        %v904 = vpop.permute.xlu0 %903
        %906 = vrot.lane.b32.xlu0 %v867, 64
        %v907 = vpop.permute.xlu0 %906
        %909 = vrot.lane.b32.xlu0 %v871, 96
        %v910 = vpop.permute.xlu0 %909
        %913 = vrot.lane.b32.xlu0 %v877, 32
        %v914 = vpop.permute.xlu0 %913
        %916 = vrot.lane.b32.xlu0 %v881, 64
        %v917 = vpop.permute.xlu0 %916
        %v919 = vsel %vm208, %v900, %v859
        %v920 = vsel %vm505, %v919, %v904
        %v921 = vsel %vm507, %v920, %v907
        %v922 = vsel %vm208, %v910, %v873
        %v923 = vsel %vm505, %v922, %v914
        %v924 = vsel %vm507, %v923, %v917
        %v927 = vrot.slane %v924, 7
        %v928 = vsel %vm515, %v921, %v927
        %s930 = scalar_lea.vmem %s191, 19 [#allocation2]
        %931 = vst.msk [vmem:[%s930] ss:$8 sm:$0x3] %vm521, %v928
        %932 = vst.msk [vmem:[%s930] ss:$8 sm:$0x0] %vm521, %v928
        %v934 = vrot.slane %v473, 1
        %935 = vrot.lane.b32.xlu0 %v934, 32
        %v936 = vpop.permute.xlu0 %935
        %v938 = vrot.slane %v473, 2
        %939 = vrot.lane.b32.xlu0 %v938, 64
        %v940 = vpop.permute.xlu0 %939
        %v942 = vrot.slane %v473, 3
        %943 = vrot.lane.b32.xlu0 %v942, 96
        %v944 = vpop.permute.xlu0 %943
        %v946 = vrot.slane %v473, 4
        %v948 = vrot.slane %v473, 5
        %949 = vrot.lane.b32.xlu0 %v948, 32
        %v950 = vpop.permute.xlu0 %949
        %v952 = vrot.slane %v473, 6
        %953 = vrot.lane.b32.xlu0 %v952, 64
        %v954 = vpop.permute.xlu0 %953
        %v956 = vrot.slane %v473, 7
        %957 = vrot.lane.b32.xlu0 %v956, 96
        %v958 = vpop.permute.xlu0 %957
        %v960 = vsel %vm208, %v473, %v936
        %v961 = vsel %vm505, %v960, %v940
        %v962 = vsel %vm507, %v961, %v944
        %v963 = vsel %vm208, %v946, %v950
        %v964 = vsel %vm505, %v963, %v954
        %v965 = vsel %vm507, %v964, %v958
        %v968 = vrot.slane %v965, 7
        %v969 = vsel %vm515, %v962, %v968
        %s971 = scalar_lea.vmem %s191, 20 [#allocation2]
        %972 = vst.msk [vmem:[%s971] ss:$8 sm:$0x3] %vm521, %v969
        %973 = vst.msk [vmem:[%s971] ss:$8 sm:$0x0] %vm521, %v969
        %974 = vrot.lane.b32.xlu0 %v473, 96
        %v975 = vpop.permute.xlu0 %974
        %978 = vrot.lane.b32.xlu0 %v938, 32
        %v979 = vpop.permute.xlu0 %978
        %981 = vrot.lane.b32.xlu0 %v942, 64
        %v982 = vpop.permute.xlu0 %981
        %984 = vrot.lane.b32.xlu0 %v946, 96
        %v985 = vpop.permute.xlu0 %984
        %988 = vrot.lane.b32.xlu0 %v952, 32
        %v989 = vpop.permute.xlu0 %988
        %991 = vrot.lane.b32.xlu0 %v956, 64
        %v992 = vpop.permute.xlu0 %991
        %v994 = vsel %vm208, %v975, %v934
        %v995 = vsel %vm505, %v994, %v979
        %v996 = vsel %vm507, %v995, %v982
        %v997 = vsel %vm208, %v985, %v948
        %v998 = vsel %vm505, %v997, %v989
        %v999 = vsel %vm507, %v998, %v992
        %v1002 = vrot.slane %v999, 7
        %v1003 = vsel %vm515, %v996, %v1002
        %s1005 = scalar_lea.vmem %s191, 21 [#allocation2]
        %1006 = vst.msk [vmem:[%s1005] ss:$8 sm:$0x3] %vm521, %v1003
        %1007 = vst.msk [vmem:[%s1005] ss:$8 sm:$0x0] %vm521, %v1003
        %v1009 = vrot.slane %v475, 1
        %1010 = vrot.lane.b32.xlu0 %v1009, 32
        %v1011 = vpop.permute.xlu0 %1010
        %v1013 = vrot.slane %v475, 2
        %1014 = vrot.lane.b32.xlu0 %v1013, 64
        %v1015 = vpop.permute.xlu0 %1014
        %v1017 = vrot.slane %v475, 3
        %1018 = vrot.lane.b32.xlu0 %v1017, 96
        %v1019 = vpop.permute.xlu0 %1018
        %v1021 = vrot.slane %v475, 4
        %v1023 = vrot.slane %v475, 5
        %1024 = vrot.lane.b32.xlu0 %v1023, 32
        %v1025 = vpop.permute.xlu0 %1024
        %v1027 = vrot.slane %v475, 6
        %1028 = vrot.lane.b32.xlu0 %v1027, 64
        %v1029 = vpop.permute.xlu0 %1028
        %v1031 = vrot.slane %v475, 7
        %1032 = vrot.lane.b32.xlu0 %v1031, 96
        %v1033 = vpop.permute.xlu0 %1032
        %v1035 = vsel %vm208, %v475, %v1011
        %v1036 = vsel %vm505, %v1035, %v1015
        %v1037 = vsel %vm507, %v1036, %v1019
        %v1038 = vsel %vm208, %v1021, %v1025
        %v1039 = vsel %vm505, %v1038, %v1029
        %v1040 = vsel %vm507, %v1039, %v1033
        %v1043 = vrot.slane %v1040, 7
        %v1044 = vsel %vm515, %v1037, %v1043
        %s1046 = scalar_lea.vmem %s191, 22 [#allocation2]
        %1047 = vst.msk [vmem:[%s1046] ss:$8 sm:$0x3] %vm521, %v1044
        %1048 = vst.msk [vmem:[%s1046] ss:$8 sm:$0x0] %vm521, %v1044
        %1049 = vrot.lane.b32.xlu0 %v475, 96
        %v1050 = vpop.permute.xlu0 %1049
        %1053 = vrot.lane.b32.xlu0 %v1013, 32
        %v1054 = vpop.permute.xlu0 %1053
        %1056 = vrot.lane.b32.xlu0 %v1017, 64
        %v1057 = vpop.permute.xlu0 %1056
        %1059 = vrot.lane.b32.xlu0 %v1021, 96
        %v1060 = vpop.permute.xlu0 %1059
        %1063 = vrot.lane.b32.xlu0 %v1027, 32
        %v1064 = vpop.permute.xlu0 %1063
        %1066 = vrot.lane.b32.xlu0 %v1031, 64
        %v1067 = vpop.permute.xlu0 %1066
        %v1069 = vsel %vm208, %v1050, %v1009
        %v1070 = vsel %vm505, %v1069, %v1054
        %v1071 = vsel %vm507, %v1070, %v1057
        %v1072 = vsel %vm208, %v1060, %v1023
        %v1073 = vsel %vm505, %v1072, %v1064
        %v1074 = vsel %vm507, %v1073, %v1067
        %v1077 = vrot.slane %v1074, 7
        %v1078 = vsel %vm515, %v1071, %v1077
        %s1080 = scalar_lea.vmem %s191, 23 [#allocation2]
        %1081 = vst.msk [vmem:[%s1080] ss:$8 sm:$0x3] %vm521, %v1078
        %1082 = vst.msk [vmem:[%s1080] ss:$8 sm:$0x0] %vm521, %v1078
        %s1083 = sand.u32 %s115, 1
        %s1084 = scalar_lea.sflag [#allocation3], %s1083
        %s1085 = sand.u32 %s115, 1
        %s1086 = smul.addr %s1085, 32
        %s1087 = scalar_lea.vmem [#allocation2], %s1086
        // Predicated region
        $region37: #{tpu_custom_call.1} parent=35 // pred_check
          %p1088 = pneg %p125
        $region38: #{tpu_custom_call.1} parent=35 // pred_check_branch
          %1090 = sbr.rel (%p1088) target = $region40
        $region39: #{tpu_custom_call.1} parent=35 // pred_region
          %s1091 = smul.u32 2, %s18
          %1093 = vsyncadd %s1084, 0
          %s1094 = smul.addr %s1091, 2
          %s1095 = smul.addr %s1094, 8
          %s1096 = scalar_lea.hbm %s4, %s1095
          %s1097 = sshll.u32 %s1087, 4
          %s1098 = int_to_ptr.vmem [resolvable:$true] %s1097
          %s1099 = sshll.u32 %s1096, 4
          %s1100 = int_to_ptr.hbm [resolvable:$true] %s1099
          %1105 = dma.vmem_to_hbm [thread:$0]  %s1098, 512, %s1100, %s1084, 256, 256, 16
        $region40: #{tpu_custom_call.1} parent=35 // pred_fallthru
          _
      $region36: #{tpu_custom_call.1} parent=5 // pred_fallthru
        _
      %p1106 = scmp.le.s32.totalorder 2, %s13
      // Predicated region
      $region41: #{tpu_custom_call.1} parent=5 // pred_check
        %p1107 = pneg %p1106
      $region42: #{tpu_custom_call.1} parent=5 // pred_check_branch
        %1109 = sbr.rel (%p1107) target = $region44
      $region43: #{tpu_custom_call.1} parent=5 // pred_region
        %s1110 = ssub.s32 %s13, 2
        // Predicated region
        $region45: #{tpu_custom_call.1} parent=43 // pred_check
          %p1111 = pneg %p131
        $region46: #{tpu_custom_call.1} parent=43 // pred_check_branch
          %1113 = sbr.rel (%p1111) target = $region48
        $region47: #{tpu_custom_call.1} parent=43 // pred_region
          %s1114 = sand.u32 %s116, 1
          %s1115 = scalar_lea.sflag [#allocation3], %s1114
          %s1116 = sand.u32 %s116, 1
          %s1117 = smul.addr %s1116, 32
          %s1118 = scalar_lea.vmem [#allocation2], %s1117
          %1120 = dma.done %s1115, 512
        $region48: #{tpu_custom_call.1} parent=43 // pred_fallthru
          _
      $region44: #{tpu_custom_call.1} parent=5 // pred_fallthru
        _
    $region6: #{tpu_custom_call.1} parent=1 // loop_footer
      %s17 = sadd.s32 1, %s13
    $region7: #{tpu_custom_call.1} parent=1 // loop_footer_branch
      %12 = sbr.rel target = $region3
    $region8: #{tpu_custom_call.1} parent=1 // loop_exit
      _
    %1121 = vsyncpa [#allocation3], 1
    %s1122 = scalar_lea.sflag [#allocation3], 1
    %1123 = vsyncpa %s1122, 1

</llo_original>
